<compile_context>
chip_gen: v7x
topology: tpu7x:2x2x1
jax: 0.10.0
libtpu: 0.0.40
codegen_flags: <defaults>
</compile_context>

<pallas_src>
import functools

import jax
import jax.numpy as jnp
import numpy as np
from jax import lax
from jax.experimental import pallas as pl
from jax.experimental.pallas import tpu as pltpu


def _residual_block_kernel(x_ref, m_ref, w1_ref, b1_ref, w2_ref, b2_ref, o_ref,
                           *, W, use_bf16):
    C_pad, L = x_ref.shape
    x = x_ref[...]                                   # (C_pad, L) f32, lane-dense

    cdt = jnp.bfloat16 if use_bf16 else jnp.float32

    # Hoisted once, reused by both convs: (1, L) -> (C_pad, L) mask broadcasts.
    # Masks were precomputed in the wrapper; no iota/mod work in the body.
    masks_b = [jnp.broadcast_to(m_ref[j:j + 1, :], (C_pad, L)).astype(cdt)
               for j in range(8)]

    offsets = [(dy, dx) for dy in (-1, 0, 1) for dx in (-1, 0, 1)]

    def conv3x3(inp, w_ref, b_ref):
        # inp: (C_pad, L) in compute dtype.  Accumulate 9 per-tap MXU matmuls
        # directly in f32 -- no (9*C, L) im2col buffer, no extra VMEM copies.
        acc = None
        mj = 0
        for t, (dy, dx) in enumerate(offsets):
            if dy == 0 and dx == 0:
                tap = inp
            else:
                s = dy * W + dx
                rolled = pltpu.roll(inp, shift=(-s) % L, axis=1)   # XLU lane roll
                tap = rolled * masks_b[mj]                         # zero SAME pad
                mj += 1
            part = jnp.dot(w_ref[t], tap, preferred_element_type=jnp.float32)
            acc = part if acc is None else acc + part
        return acc + b_ref[...]                                    # (C_pad, L) f32

    xc = x.astype(cdt)
    h = jnp.maximum(conv3x3(xc, w1_ref, b1_ref), 0.0)              # conv1 + ReLU
    y = conv3x3(h.astype(cdt), w2_ref, b2_ref) + x                 # conv2 + residual
    o_ref[...] = jnp.maximum(y, 0.0).astype(o_ref.dtype)           # final ReLU


def _vmem_capacity_bytes():
    try:
        return int(pltpu.get_tpu_info().vmem_capacity_bytes)
    except Exception:
        return 64 * 1024 * 1024            # conservative (v7x per-core) fallback


def _pick_images_per_block(N, HW, C_pad, vmem_cap_bytes):
    """Whole images per grid step, sized by working set; prefer >=2 grid steps."""
    ws_mult = 20                                     # in-kernel live set per x-block byte
    budget = int(vmem_cap_bytes * 0.7)
    target_x_bytes = min(4 << 20, max(budget // ws_mult, C_pad * HW * 4))

    def x_bytes(nt):
        return C_pad * nt * HW * 4

    divisors = [d for d in range(1, N + 1) if N % d == 0]

    def aligned(nt):
        return (nt * HW) % 128 == 0

    # Prefer lane-aligned blocks with >=2 grid steps (v7x megacore + pipeline).
    prefer = [d for d in divisors
              if d <= max(1, N // 2) and aligned(d) and x_bytes(d) <= target_x_bytes]
    if prefer:
        return max(prefer)
    fallback = [d for d in divisors if aligned(d) and x_bytes(d) <= target_x_bytes]
    if fallback:
        return max(fallback)
    # TODO(synk): row-band tiling instead of whole-tensor fallback for huge inputs.
    return N


def residual_block(x_nchw, w1_oihw, b1, w2_oihw, b2, *, use_bf16=False):
    """x_nchw: (N, C, H, W) f32; weights OIHW (C, C, 3, 3); biases (C,)."""
    N, C, H, W = x_nchw.shape
    HW = H * W
    C_pad = ((C + 7) // 8) * 8
    cdt = jnp.bfloat16 if use_bf16 else jnp.float32

    vmem_cap = _vmem_capacity_bytes()
    nt = _pick_images_per_block(N, HW, C_pad, vmem_cap)
    grid = (N // nt,)
    L = nt * HW

    # --- layout plumbing (pure XLA / numpy, outside the kernel) ---------------
    # NCHW -> channel-major (C_pad, N*HW); OIHW -> (9, C_pad, C_pad) per-tap;
    # bias -> (C_pad, 1).
    x_cm = jnp.transpose(x_nchw.reshape(N, C, HW), (1, 0, 2)).reshape(C, N * HW)
    if C_pad != C:
        x_cm = jnp.pad(x_cm, ((0, C_pad - C), (0, 0)))

    def prep_w(w):
        wt = jnp.transpose(w, (2, 3, 0, 1)).reshape(9, C, C)      # (ky*3+kx, O, I)
        if C_pad != C:
            wt = jnp.pad(wt, ((0, 0), (0, C_pad - C), (0, C_pad - C)))
        return wt.astype(cdt)

    def prep_b(b):
        bc = b.reshape(C, 1).astype(jnp.float32)
        if C_pad != C:
            bc = jnp.pad(bc, ((0, C_pad - C), (0, 0)))
        return bc

    w1p, w2p = prep_w(w1_oihw), prep_w(w2_oihw)
    b1c, b2c = prep_b(b1), prep_b(b2)

    # SAME-padding boundary masks, identical for every block (whole-image blocks):
    # 8 off-center taps in (dy, dx) row-major order, 0/1 f32, shape (8, L).
    flat = np.arange(L)
    col = flat % W
    row = (flat // W) % H
    mask_rows = []
    for dy in (-1, 0, 1):
        for dx in (-1, 0, 1):
            if dy == 0 and dx == 0:
                continue
            m = ((row + dy >= 0) & (row + dy < H) &
                 (col + dx >= 0) & (col + dx < W))
            mask_rows.append(m.astype(np.float32))
    mask8 = jnp.asarray(np.stack(mask_rows, axis=0))               # (8, L)

    # --- VMEM budget estimate -> vmem_limit ----------------------------------
    x_blk = C_pad * L * 4
    est_ws = 20 * x_blk + 2 * (8 * L * 4) + 4 * (9 * C_pad * C_pad * 4)
    vmem_limit = int(min(vmem_cap, max(32 << 20, 2 * est_ws)))

    kernel = functools.partial(_residual_block_kernel, W=W, use_bf16=use_bf16)

    out_cm = pl.pallas_call(
        kernel,
        out_shape=jax.ShapeDtypeStruct((C_pad, N * HW), x_nchw.dtype),
        grid_spec=pltpu.PrefetchScalarGridSpec(
            num_scalar_prefetch=0,
            grid=grid,
            in_specs=[
                pl.BlockSpec((C_pad, L), lambda i: (0, i)),           # x
                pl.BlockSpec((8, L), lambda i: (0, 0)),               # masks
                pl.BlockSpec((9, C_pad, C_pad), lambda i: (0, 0, 0)),  # w1
                pl.BlockSpec((C_pad, 1), lambda i: (0, 0)),           # b1
                pl.BlockSpec((9, C_pad, C_pad), lambda i: (0, 0, 0)),  # w2
                pl.BlockSpec((C_pad, 1), lambda i: (0, 0)),           # b2
            ],
            out_specs=pl.BlockSpec((C_pad, L), lambda i: (0, i)),
        ),
        compiler_params=pltpu.CompilerParams(
            dimension_semantics=("parallel",),
            vmem_limit_bytes=vmem_limit,
        ),
    )(x_cm, mask8, w1p, b1c, w2p, b2c)

    # (C_pad, N*HW) -> (N, C, H, W)
    out = out_cm[:C].reshape(C, N, HW)
    return jnp.transpose(out, (1, 0, 2)).reshape(N, C, H, W)


def residual_block_ref(x, w1, b1, w2, b2):
    """Pure-JAX reference mirroring the PyTorch module (NCHW / OIHW)."""
    dn = ("NCHW", "OIHW", "NCHW")

    def conv(x_, w, b):
        y = lax.conv_general_dilated(x_, w, window_strides=(1, 1),
                                     padding="SAME", dimension_numbers=dn)
        return y + b[None, :, None, None]

    out = jax.nn.relu(conv(x, w1, b1))
    out = conv(out, w2, b2) + x
    return jax.nn.relu(out)


if __name__ == "__main__":
    N, C, H, W = 2, 4, 16, 16

    key = jax.random.PRNGKey(0)
    kx, k1, k2, k3, k4 = jax.random.split(key, 5)

    x = jax.random.normal(kx, (N, C, H, W), jnp.float32)

    # Deterministic synthetic params matching nn.Conv2d(C, C, 3, padding=1):
    # weight (C, C, 3, 3) OIHW, bias (C,). (Kaiming-uniform-like range.)
    bound = 1.0 / np.sqrt(C * 3 * 3)
    w1 = jax.random.uniform(k1, (C, C, 3, 3), jnp.float32, -bound, bound)
    b1 = jax.random.uniform(k2, (C,), jnp.float32, -bound, bound)
    w2 = jax.random.uniform(k3, (C, C, 3, 3), jnp.float32, -bound, bound)
    b2 = jax.random.uniform(k4, (C,), jnp.float32, -bound, bound)

    out = jax.block_until_ready(residual_block(x, w1, b1, w2, b2, use_bf16=False))
    ref = jax.block_until_ready(residual_block_ref(x, w1, b1, w2, b2))

    assert out.shape == x.shape and out.dtype == x.dtype
    np.testing.assert_allclose(np.asarray(out), np.asarray(ref),
                               rtol=1e-4, atol=1e-4)
    print("KERNEL_OK")
</pallas_src>

<mosaic_0001>
module attributes {stable_mosaic.version = 11 : i64} {
  func.func @_residual_block_kernel(%arg0: i32, %arg1: memref<8x256xf32, #tpu.memory_space<vmem>>, %arg2: memref<8x256xf32, #tpu.memory_space<vmem>>, %arg3: memref<9x8x8xf32, #tpu.memory_space<vmem>>, %arg4: memref<8x1xf32, #tpu.memory_space<vmem>>, %arg5: memref<9x8x8xf32, #tpu.memory_space<vmem>>, %arg6: memref<8x1xf32, #tpu.memory_space<vmem>>, %arg7: memref<8x256xf32, #tpu.memory_space<vmem>>) attributes {dimension_semantics = [#tpu.dimension_semantics<parallel>], iteration_bounds = array<i64: 2>, scalar_prefetch = 0 : i64, scratch_operands = 0 : i64, tpu.core_type = #tpu.core_type<tc>, window_params = [{transform_indices = @transform_0, window_bounds = array<i64: 8, 256>}, {pipeline_mode = #tpu.pipeline_mode<synchronous>, transform_indices = @transform_1, window_bounds = array<i64: 8, 256>}, {pipeline_mode = #tpu.pipeline_mode<synchronous>, transform_indices = @transform_2, window_bounds = array<i64: 9, 8, 8>}, {pipeline_mode = #tpu.pipeline_mode<synchronous>, transform_indices = @transform_3, window_bounds = array<i64: 8, 1>}, {pipeline_mode = #tpu.pipeline_mode<synchronous>, transform_indices = @transform_4, window_bounds = array<i64: 9, 8, 8>}, {pipeline_mode = #tpu.pipeline_mode<synchronous>, transform_indices = @transform_5, window_bounds = array<i64: 8, 1>}, {transform_indices = @transform_6, window_bounds = array<i64: 8, 256>}]} {
    %c0 = arith.constant 0 : index
    %c0_0 = arith.constant 0 : index
    %0 = vector.load %arg1[%c0, %c0_0] : memref<8x256xf32, #tpu.memory_space<vmem>>, vector<8x256xf32>
    %c0_1 = arith.constant 0 : index
    %c0_2 = arith.constant 0 : index
    %1 = vector.load %arg2[%c0_1, %c0_2] : memref<8x256xf32, #tpu.memory_space<vmem>>, vector<1x256xf32>
    %2 = vector.shape_cast %1 : vector<1x256xf32> to vector<1x256xf32>
    %3 = vector.broadcast %2 : vector<1x256xf32> to vector<8x256xf32>
    %c1 = arith.constant 1 : index
    %c0_3 = arith.constant 0 : index
    %4 = vector.load %arg2[%c1, %c0_3] : memref<8x256xf32, #tpu.memory_space<vmem>>, vector<1x256xf32>
    %5 = vector.shape_cast %4 : vector<1x256xf32> to vector<1x256xf32>
    %6 = vector.broadcast %5 : vector<1x256xf32> to vector<8x256xf32>
    %c2 = arith.constant 2 : index
    %c0_4 = arith.constant 0 : index
    %7 = vector.load %arg2[%c2, %c0_4] : memref<8x256xf32, #tpu.memory_space<vmem>>, vector<1x256xf32>
    %8 = vector.shape_cast %7 : vector<1x256xf32> to vector<1x256xf32>
    %9 = vector.broadcast %8 : vector<1x256xf32> to vector<8x256xf32>
    %c3 = arith.constant 3 : index
    %c0_5 = arith.constant 0 : index
    %10 = vector.load %arg2[%c3, %c0_5] : memref<8x256xf32, #tpu.memory_space<vmem>>, vector<1x256xf32>
    %11 = vector.shape_cast %10 : vector<1x256xf32> to vector<1x256xf32>
    %12 = vector.broadcast %11 : vector<1x256xf32> to vector<8x256xf32>
    %c4 = arith.constant 4 : index
    %c0_6 = arith.constant 0 : index
    %13 = vector.load %arg2[%c4, %c0_6] : memref<8x256xf32, #tpu.memory_space<vmem>>, vector<1x256xf32>
    %14 = vector.shape_cast %13 : vector<1x256xf32> to vector<1x256xf32>
    %15 = vector.broadcast %14 : vector<1x256xf32> to vector<8x256xf32>
    %c5 = arith.constant 5 : index
    %c0_7 = arith.constant 0 : index
    %16 = vector.load %arg2[%c5, %c0_7] : memref<8x256xf32, #tpu.memory_space<vmem>>, vector<1x256xf32>
    %17 = vector.shape_cast %16 : vector<1x256xf32> to vector<1x256xf32>
    %18 = vector.broadcast %17 : vector<1x256xf32> to vector<8x256xf32>
    %c6 = arith.constant 6 : index
    %c0_8 = arith.constant 0 : index
    %19 = vector.load %arg2[%c6, %c0_8] : memref<8x256xf32, #tpu.memory_space<vmem>>, vector<1x256xf32>
    %20 = vector.shape_cast %19 : vector<1x256xf32> to vector<1x256xf32>
    %21 = vector.broadcast %20 : vector<1x256xf32> to vector<8x256xf32>
    %c7 = arith.constant 7 : index
    %c0_9 = arith.constant 0 : index
    %22 = vector.load %arg2[%c7, %c0_9] : memref<8x256xf32, #tpu.memory_space<vmem>>, vector<1x256xf32>
    %23 = vector.shape_cast %22 : vector<1x256xf32> to vector<1x256xf32>
    %24 = vector.broadcast %23 : vector<1x256xf32> to vector<8x256xf32>
    %c17_i32 = arith.constant 17 : i32
    %25 = tpu.dynamic_rotate %0 by %c17_i32 dim 1 : vector<8x256xf32>, i32 -> vector<8x256xf32>
    %26 = arith.mulf %25, %3 : vector<8x256xf32>
    %c0_10 = arith.constant 0 : index
    %c0_11 = arith.constant 0 : index
    %c0_12 = arith.constant 0 : index
    %27 = vector.load %arg3[%c0_10, %c0_11, %c0_12] : memref<9x8x8xf32, #tpu.memory_space<vmem>>, vector<1x8x8xf32>
    %28 = vector.shape_cast %27 : vector<1x8x8xf32> to vector<8x8xf32>
    %cst = arith.constant dense<0.000000e+00> : vector<8x256xf32>
    %29 = tpu.matmul %28, %26, %cst {dimension_numbers = #tpu.dot_dimension_numbers<[1], [0], [0], [1], [0, 0, 1, 1], [], []>} : vector<8x8xf32>, vector<8x256xf32>, vector<8x256xf32> -> vector<8x256xf32>
    %c16_i32 = arith.constant 16 : i32
    %30 = tpu.dynamic_rotate %0 by %c16_i32 dim 1 : vector<8x256xf32>, i32 -> vector<8x256xf32>
    %31 = arith.mulf %30, %6 : vector<8x256xf32>
    %c1_13 = arith.constant 1 : index
    %c0_14 = arith.constant 0 : index
    %c0_15 = arith.constant 0 : index
    %32 = vector.load %arg3[%c1_13, %c0_14, %c0_15] : memref<9x8x8xf32, #tpu.memory_space<vmem>>, vector<1x8x8xf32>
    %33 = vector.shape_cast %32 : vector<1x8x8xf32> to vector<8x8xf32>
    %cst_16 = arith.constant dense<0.000000e+00> : vector<8x256xf32>
    %34 = tpu.matmul %33, %31, %cst_16 {dimension_numbers = #tpu.dot_dimension_numbers<[1], [0], [0], [1], [0, 0, 1, 1], [], []>} : vector<8x8xf32>, vector<8x256xf32>, vector<8x256xf32> -> vector<8x256xf32>
    %35 = arith.addf %29, %34 : vector<8x256xf32>
    %c15_i32 = arith.constant 15 : i32
    %36 = tpu.dynamic_rotate %0 by %c15_i32 dim 1 : vector<8x256xf32>, i32 -> vector<8x256xf32>
    %37 = arith.mulf %36, %9 : vector<8x256xf32>
    %c2_17 = arith.constant 2 : index
    %c0_18 = arith.constant 0 : index
    %c0_19 = arith.constant 0 : index
    %38 = vector.load %arg3[%c2_17, %c0_18, %c0_19] : memref<9x8x8xf32, #tpu.memory_space<vmem>>, vector<1x8x8xf32>
    %39 = vector.shape_cast %38 : vector<1x8x8xf32> to vector<8x8xf32>
    %cst_20 = arith.constant dense<0.000000e+00> : vector<8x256xf32>
    %40 = tpu.matmul %39, %37, %cst_20 {dimension_numbers = #tpu.dot_dimension_numbers<[1], [0], [0], [1], [0, 0, 1, 1], [], []>} : vector<8x8xf32>, vector<8x256xf32>, vector<8x256xf32> -> vector<8x256xf32>
    %41 = arith.addf %35, %40 : vector<8x256xf32>
    %c1_i32 = arith.constant 1 : i32
    %42 = tpu.dynamic_rotate %0 by %c1_i32 dim 1 : vector<8x256xf32>, i32 -> vector<8x256xf32>
    %43 = arith.mulf %42, %12 : vector<8x256xf32>
    %c3_21 = arith.constant 3 : index
    %c0_22 = arith.constant 0 : index
    %c0_23 = arith.constant 0 : index
    %44 = vector.load %arg3[%c3_21, %c0_22, %c0_23] : memref<9x8x8xf32, #tpu.memory_space<vmem>>, vector<1x8x8xf32>
    %45 = vector.shape_cast %44 : vector<1x8x8xf32> to vector<8x8xf32>
    %cst_24 = arith.constant dense<0.000000e+00> : vector<8x256xf32>
    %46 = tpu.matmul %45, %43, %cst_24 {dimension_numbers = #tpu.dot_dimension_numbers<[1], [0], [0], [1], [0, 0, 1, 1], [], []>} : vector<8x8xf32>, vector<8x256xf32>, vector<8x256xf32> -> vector<8x256xf32>
    %47 = arith.addf %41, %46 : vector<8x256xf32>
    %c4_25 = arith.constant 4 : index
    %c0_26 = arith.constant 0 : index
    %c0_27 = arith.constant 0 : index
    %48 = vector.load %arg3[%c4_25, %c0_26, %c0_27] : memref<9x8x8xf32, #tpu.memory_space<vmem>>, vector<1x8x8xf32>
    %49 = vector.shape_cast %48 : vector<1x8x8xf32> to vector<8x8xf32>
    %cst_28 = arith.constant dense<0.000000e+00> : vector<8x256xf32>
    %50 = tpu.matmul %49, %0, %cst_28 {dimension_numbers = #tpu.dot_dimension_numbers<[1], [0], [0], [1], [0, 0, 1, 1], [], []>} : vector<8x8xf32>, vector<8x256xf32>, vector<8x256xf32> -> vector<8x256xf32>
    %51 = arith.addf %47, %50 : vector<8x256xf32>
    %c255_i32 = arith.constant 255 : i32
    %52 = tpu.dynamic_rotate %0 by %c255_i32 dim 1 : vector<8x256xf32>, i32 -> vector<8x256xf32>
    %53 = arith.mulf %52, %15 : vector<8x256xf32>
    %c5_29 = arith.constant 5 : index
    %c0_30 = arith.constant 0 : index
    %c0_31 = arith.constant 0 : index
    %54 = vector.load %arg3[%c5_29, %c0_30, %c0_31] : memref<9x8x8xf32, #tpu.memory_space<vmem>>, vector<1x8x8xf32>
    %55 = vector.shape_cast %54 : vector<1x8x8xf32> to vector<8x8xf32>
    %cst_32 = arith.constant dense<0.000000e+00> : vector<8x256xf32>
    %56 = tpu.matmul %55, %53, %cst_32 {dimension_numbers = #tpu.dot_dimension_numbers<[1], [0], [0], [1], [0, 0, 1, 1], [], []>} : vector<8x8xf32>, vector<8x256xf32>, vector<8x256xf32> -> vector<8x256xf32>
    %57 = arith.addf %51, %56 : vector<8x256xf32>
    %c241_i32 = arith.constant 241 : i32
    %58 = tpu.dynamic_rotate %0 by %c241_i32 dim 1 : vector<8x256xf32>, i32 -> vector<8x256xf32>
    %59 = arith.mulf %58, %18 : vector<8x256xf32>
    %c6_33 = arith.constant 6 : index
    %c0_34 = arith.constant 0 : index
    %c0_35 = arith.constant 0 : index
    %60 = vector.load %arg3[%c6_33, %c0_34, %c0_35] : memref<9x8x8xf32, #tpu.memory_space<vmem>>, vector<1x8x8xf32>
    %61 = vector.shape_cast %60 : vector<1x8x8xf32> to vector<8x8xf32>
    %cst_36 = arith.constant dense<0.000000e+00> : vector<8x256xf32>
    %62 = tpu.matmul %61, %59, %cst_36 {dimension_numbers = #tpu.dot_dimension_numbers<[1], [0], [0], [1], [0, 0, 1, 1], [], []>} : vector<8x8xf32>, vector<8x256xf32>, vector<8x256xf32> -> vector<8x256xf32>
    %63 = arith.addf %57, %62 : vector<8x256xf32>
    %c240_i32 = arith.constant 240 : i32
    %64 = tpu.dynamic_rotate %0 by %c240_i32 dim 1 : vector<8x256xf32>, i32 -> vector<8x256xf32>
    %65 = arith.mulf %64, %21 : vector<8x256xf32>
    %c7_37 = arith.constant 7 : index
    %c0_38 = arith.constant 0 : index
    %c0_39 = arith.constant 0 : index
    %66 = vector.load %arg3[%c7_37, %c0_38, %c0_39] : memref<9x8x8xf32, #tpu.memory_space<vmem>>, vector<1x8x8xf32>
    %67 = vector.shape_cast %66 : vector<1x8x8xf32> to vector<8x8xf32>
    %cst_40 = arith.constant dense<0.000000e+00> : vector<8x256xf32>
    %68 = tpu.matmul %67, %65, %cst_40 {dimension_numbers = #tpu.dot_dimension_numbers<[1], [0], [0], [1], [0, 0, 1, 1], [], []>} : vector<8x8xf32>, vector<8x256xf32>, vector<8x256xf32> -> vector<8x256xf32>
    %69 = arith.addf %63, %68 : vector<8x256xf32>
    %c239_i32 = arith.constant 239 : i32
    %70 = tpu.dynamic_rotate %0 by %c239_i32 dim 1 : vector<8x256xf32>, i32 -> vector<8x256xf32>
    %71 = arith.mulf %70, %24 : vector<8x256xf32>
    %c8 = arith.constant 8 : index
    %c0_41 = arith.constant 0 : index
    %c0_42 = arith.constant 0 : index
    %72 = vector.load %arg3[%c8, %c0_41, %c0_42] : memref<9x8x8xf32, #tpu.memory_space<vmem>>, vector<1x8x8xf32>
    %73 = vector.shape_cast %72 : vector<1x8x8xf32> to vector<8x8xf32>
    %cst_43 = arith.constant dense<0.000000e+00> : vector<8x256xf32>
    %74 = tpu.matmul %73, %71, %cst_43 {dimension_numbers = #tpu.dot_dimension_numbers<[1], [0], [0], [1], [0, 0, 1, 1], [], []>} : vector<8x8xf32>, vector<8x256xf32>, vector<8x256xf32> -> vector<8x256xf32>
    %75 = arith.addf %69, %74 : vector<8x256xf32>
    %c0_44 = arith.constant 0 : index
    %c0_45 = arith.constant 0 : index
    %76 = vector.load %arg4[%c0_44, %c0_45] : memref<8x1xf32, #tpu.memory_space<vmem>>, vector<8x1xf32>
    %77 = vector.broadcast %76 : vector<8x1xf32> to vector<8x256xf32>
    %78 = arith.addf %75, %77 : vector<8x256xf32>
    %cst_46 = arith.constant 0.000000e+00 : f32
    %79 = vector.broadcast %cst_46 : f32 to vector<8x256xf32>
    %80 = arith.maximumf %78, %79 : vector<8x256xf32>
    %c17_i32_47 = arith.constant 17 : i32
    %81 = tpu.dynamic_rotate %80 by %c17_i32_47 dim 1 : vector<8x256xf32>, i32 -> vector<8x256xf32>
    %82 = arith.mulf %81, %3 : vector<8x256xf32>
    %c0_48 = arith.constant 0 : index
    %c0_49 = arith.constant 0 : index
    %c0_50 = arith.constant 0 : index
    %83 = vector.load %arg5[%c0_48, %c0_49, %c0_50] : memref<9x8x8xf32, #tpu.memory_space<vmem>>, vector<1x8x8xf32>
    %84 = vector.shape_cast %83 : vector<1x8x8xf32> to vector<8x8xf32>
    %cst_51 = arith.constant dense<0.000000e+00> : vector<8x256xf32>
    %85 = tpu.matmul %84, %82, %cst_51 {dimension_numbers = #tpu.dot_dimension_numbers<[1], [0], [0], [1], [0, 0, 1, 1], [], []>} : vector<8x8xf32>, vector<8x256xf32>, vector<8x256xf32> -> vector<8x256xf32>
    %c16_i32_52 = arith.constant 16 : i32
    %86 = tpu.dynamic_rotate %80 by %c16_i32_52 dim 1 : vector<8x256xf32>, i32 -> vector<8x256xf32>
    %87 = arith.mulf %86, %6 : vector<8x256xf32>
    %c1_53 = arith.constant 1 : index
    %c0_54 = arith.constant 0 : index
    %c0_55 = arith.constant 0 : index
    %88 = vector.load %arg5[%c1_53, %c0_54, %c0_55] : memref<9x8x8xf32, #tpu.memory_space<vmem>>, vector<1x8x8xf32>
    %89 = vector.shape_cast %88 : vector<1x8x8xf32> to vector<8x8xf32>
    %cst_56 = arith.constant dense<0.000000e+00> : vector<8x256xf32>
    %90 = tpu.matmul %89, %87, %cst_56 {dimension_numbers = #tpu.dot_dimension_numbers<[1], [0], [0], [1], [0, 0, 1, 1], [], []>} : vector<8x8xf32>, vector<8x256xf32>, vector<8x256xf32> -> vector<8x256xf32>
    %91 = arith.addf %85, %90 : vector<8x256xf32>
    %c15_i32_57 = arith.constant 15 : i32
    %92 = tpu.dynamic_rotate %80 by %c15_i32_57 dim 1 : vector<8x256xf32>, i32 -> vector<8x256xf32>
    %93 = arith.mulf %92, %9 : vector<8x256xf32>
    %c2_58 = arith.constant 2 : index
    %c0_59 = arith.constant 0 : index
    %c0_60 = arith.constant 0 : index
    %94 = vector.load %arg5[%c2_58, %c0_59, %c0_60] : memref<9x8x8xf32, #tpu.memory_space<vmem>>, vector<1x8x8xf32>
    %95 = vector.shape_cast %94 : vector<1x8x8xf32> to vector<8x8xf32>
    %cst_61 = arith.constant dense<0.000000e+00> : vector<8x256xf32>
    %96 = tpu.matmul %95, %93, %cst_61 {dimension_numbers = #tpu.dot_dimension_numbers<[1], [0], [0], [1], [0, 0, 1, 1], [], []>} : vector<8x8xf32>, vector<8x256xf32>, vector<8x256xf32> -> vector<8x256xf32>
    %97 = arith.addf %91, %96 : vector<8x256xf32>
    %c1_i32_62 = arith.constant 1 : i32
    %98 = tpu.dynamic_rotate %80 by %c1_i32_62 dim 1 : vector<8x256xf32>, i32 -> vector<8x256xf32>
    %99 = arith.mulf %98, %12 : vector<8x256xf32>
    %c3_63 = arith.constant 3 : index
    %c0_64 = arith.constant 0 : index
    %c0_65 = arith.constant 0 : index
    %100 = vector.load %arg5[%c3_63, %c0_64, %c0_65] : memref<9x8x8xf32, #tpu.memory_space<vmem>>, vector<1x8x8xf32>
    %101 = vector.shape_cast %100 : vector<1x8x8xf32> to vector<8x8xf32>
    %cst_66 = arith.constant dense<0.000000e+00> : vector<8x256xf32>
    %102 = tpu.matmul %101, %99, %cst_66 {dimension_numbers = #tpu.dot_dimension_numbers<[1], [0], [0], [1], [0, 0, 1, 1], [], []>} : vector<8x8xf32>, vector<8x256xf32>, vector<8x256xf32> -> vector<8x256xf32>
    %103 = arith.addf %97, %102 : vector<8x256xf32>
    %c4_67 = arith.constant 4 : index
    %c0_68 = arith.constant 0 : index
    %c0_69 = arith.constant 0 : index
    %104 = vector.load %arg5[%c4_67, %c0_68, %c0_69] : memref<9x8x8xf32, #tpu.memory_space<vmem>>, vector<1x8x8xf32>
    %105 = vector.shape_cast %104 : vector<1x8x8xf32> to vector<8x8xf32>
    %cst_70 = arith.constant dense<0.000000e+00> : vector<8x256xf32>
    %106 = tpu.matmul %105, %80, %cst_70 {dimension_numbers = #tpu.dot_dimension_numbers<[1], [0], [0], [1], [0, 0, 1, 1], [], []>} : vector<8x8xf32>, vector<8x256xf32>, vector<8x256xf32> -> vector<8x256xf32>
    %107 = arith.addf %103, %106 : vector<8x256xf32>
    %c255_i32_71 = arith.constant 255 : i32
    %108 = tpu.dynamic_rotate %80 by %c255_i32_71 dim 1 : vector<8x256xf32>, i32 -> vector<8x256xf32>
    %109 = arith.mulf %108, %15 : vector<8x256xf32>
    %c5_72 = arith.constant 5 : index
    %c0_73 = arith.constant 0 : index
    %c0_74 = arith.constant 0 : index
    %110 = vector.load %arg5[%c5_72, %c0_73, %c0_74] : memref<9x8x8xf32, #tpu.memory_space<vmem>>, vector<1x8x8xf32>
    %111 = vector.shape_cast %110 : vector<1x8x8xf32> to vector<8x8xf32>
    %cst_75 = arith.constant dense<0.000000e+00> : vector<8x256xf32>
    %112 = tpu.matmul %111, %109, %cst_75 {dimension_numbers = #tpu.dot_dimension_numbers<[1], [0], [0], [1], [0, 0, 1, 1], [], []>} : vector<8x8xf32>, vector<8x256xf32>, vector<8x256xf32> -> vector<8x256xf32>
    %113 = arith.addf %107, %112 : vector<8x256xf32>
    %c241_i32_76 = arith.constant 241 : i32
    %114 = tpu.dynamic_rotate %80 by %c241_i32_76 dim 1 : vector<8x256xf32>, i32 -> vector<8x256xf32>
    %115 = arith.mulf %114, %18 : vector<8x256xf32>
    %c6_77 = arith.constant 6 : index
    %c0_78 = arith.constant 0 : index
    %c0_79 = arith.constant 0 : index
    %116 = vector.load %arg5[%c6_77, %c0_78, %c0_79] : memref<9x8x8xf32, #tpu.memory_space<vmem>>, vector<1x8x8xf32>
    %117 = vector.shape_cast %116 : vector<1x8x8xf32> to vector<8x8xf32>
    %cst_80 = arith.constant dense<0.000000e+00> : vector<8x256xf32>
    %118 = tpu.matmul %117, %115, %cst_80 {dimension_numbers = #tpu.dot_dimension_numbers<[1], [0], [0], [1], [0, 0, 1, 1], [], []>} : vector<8x8xf32>, vector<8x256xf32>, vector<8x256xf32> -> vector<8x256xf32>
    %119 = arith.addf %113, %118 : vector<8x256xf32>
    %c240_i32_81 = arith.constant 240 : i32
    %120 = tpu.dynamic_rotate %80 by %c240_i32_81 dim 1 : vector<8x256xf32>, i32 -> vector<8x256xf32>
    %121 = arith.mulf %120, %21 : vector<8x256xf32>
    %c7_82 = arith.constant 7 : index
    %c0_83 = arith.constant 0 : index
    %c0_84 = arith.constant 0 : index
    %122 = vector.load %arg5[%c7_82, %c0_83, %c0_84] : memref<9x8x8xf32, #tpu.memory_space<vmem>>, vector<1x8x8xf32>
    %123 = vector.shape_cast %122 : vector<1x8x8xf32> to vector<8x8xf32>
    %cst_85 = arith.constant dense<0.000000e+00> : vector<8x256xf32>
    %124 = tpu.matmul %123, %121, %cst_85 {dimension_numbers = #tpu.dot_dimension_numbers<[1], [0], [0], [1], [0, 0, 1, 1], [], []>} : vector<8x8xf32>, vector<8x256xf32>, vector<8x256xf32> -> vector<8x256xf32>
    %125 = arith.addf %119, %124 : vector<8x256xf32>
    %c239_i32_86 = arith.constant 239 : i32
    %126 = tpu.dynamic_rotate %80 by %c239_i32_86 dim 1 : vector<8x256xf32>, i32 -> vector<8x256xf32>
    %127 = arith.mulf %126, %24 : vector<8x256xf32>
    %c8_87 = arith.constant 8 : index
    %c0_88 = arith.constant 0 : index
    %c0_89 = arith.constant 0 : index
    %128 = vector.load %arg5[%c8_87, %c0_88, %c0_89] : memref<9x8x8xf32, #tpu.memory_space<vmem>>, vector<1x8x8xf32>
    %129 = vector.shape_cast %128 : vector<1x8x8xf32> to vector<8x8xf32>
    %cst_90 = arith.constant dense<0.000000e+00> : vector<8x256xf32>
    %130 = tpu.matmul %129, %127, %cst_90 {dimension_numbers = #tpu.dot_dimension_numbers<[1], [0], [0], [1], [0, 0, 1, 1], [], []>} : vector<8x8xf32>, vector<8x256xf32>, vector<8x256xf32> -> vector<8x256xf32>
    %131 = arith.addf %125, %130 : vector<8x256xf32>
    %c0_91 = arith.constant 0 : index
    %c0_92 = arith.constant 0 : index
    %132 = vector.load %arg6[%c0_91, %c0_92] : memref<8x1xf32, #tpu.memory_space<vmem>>, vector<8x1xf32>
    %133 = vector.broadcast %132 : vector<8x1xf32> to vector<8x256xf32>
    %134 = arith.addf %131, %133 : vector<8x256xf32>
    %135 = arith.addf %134, %0 : vector<8x256xf32>
    %cst_93 = arith.constant 0.000000e+00 : f32
    %136 = vector.broadcast %cst_93 : f32 to vector<8x256xf32>
    %137 = arith.maximumf %135, %136 : vector<8x256xf32>
    %c0_94 = arith.constant 0 : index
    %c0_95 = arith.constant 0 : index
    %138 = vector.load %arg7[%c0_94, %c0_95] : memref<8x256xf32, #tpu.memory_space<vmem>>, vector<8x256xf32>
    tpu.vector_store %arg7[%c0_94, %c0_95], %137 {strides = array<i32>} : memref<8x256xf32, #tpu.memory_space<vmem>>, vector<8x256xf32>,
    return
  }
  func.func @transform_0(%arg0: i32) -> (i32, i32) {
    %c0_i32 = arith.constant 0 : i32
    %c0_i32_0 = arith.constant 0 : i32
    return %c0_i32, %arg0 : i32, i32
  }
  func.func @transform_1(%arg0: i32) -> (i32, i32) {
    %c0_i32 = arith.constant 0 : i32
    %c0_i32_0 = arith.constant 0 : i32
    %c0_i32_1 = arith.constant 0 : i32
    return %c0_i32, %c0_i32_0 : i32, i32
  }
  func.func @transform_2(%arg0: i32) -> (i32, i32, i32) {
    %c0_i32 = arith.constant 0 : i32
    %c0_i32_0 = arith.constant 0 : i32
    %c0_i32_1 = arith.constant 0 : i32
    %c0_i32_2 = arith.constant 0 : i32
    return %c0_i32, %c0_i32_0, %c0_i32_1 : i32, i32, i32
  }
  func.func @transform_3(%arg0: i32) -> (i32, i32) {
    %c0_i32 = arith.constant 0 : i32
    %c0_i32_0 = arith.constant 0 : i32
    %c0_i32_1 = arith.constant 0 : i32
    return %c0_i32, %c0_i32_0 : i32, i32
  }
  func.func @transform_4(%arg0: i32) -> (i32, i32, i32) {
    %c0_i32 = arith.constant 0 : i32
    %c0_i32_0 = arith.constant 0 : i32
    %c0_i32_1 = arith.constant 0 : i32
    %c0_i32_2 = arith.constant 0 : i32
    return %c0_i32, %c0_i32_0, %c0_i32_1 : i32, i32, i32
  }
  func.func @transform_5(%arg0: i32) -> (i32, i32) {
    %c0_i32 = arith.constant 0 : i32
    %c0_i32_0 = arith.constant 0 : i32
    %c0_i32_1 = arith.constant 0 : i32
    return %c0_i32, %c0_i32_0 : i32, i32
  }
  func.func @transform_6(%arg0: i32) -> (i32, i32) {
    %c0_i32 = arith.constant 0 : i32
    %c0_i32_0 = arith.constant 0 : i32
    return %c0_i32, %arg0 : i32, i32
  }
}

</mosaic_0001>

<llo_original>
// kernel: tpu_custom_call.1
$region0: #{tpu_custom_call.1}
  #allocation0 [shape = 'u32[]', space=smem, size = 0x4, offset = 0x4, fixed_abs, tag = 'smem constant byte address 0x4 - core index']
  #allocation1 [shape = 'u32[144,128]{1,0:T(1,128)}', space=vmem, size = 0x12000, scoped, tag = 'internal scratch']
  %s0 = inlined_call_operand.vmem [shape: f32[8,512], index: 0, kind: input, shape index: {}]
  %s1 = inlined_call_operand.vmem [shape: f32[8,256], index: 1, kind: input, shape index: {}]
  %s2 = inlined_call_operand.vmem [shape: f32[9,8,8], index: 2, kind: input, shape index: {}]
  %s3 = inlined_call_operand.vmem [shape: f32[8,1], index: 3, kind: input, shape index: {}]
  %s4 = inlined_call_operand.vmem [shape: f32[9,8,8], index: 4, kind: input, shape index: {}]
  %s5 = inlined_call_operand.vmem [shape: f32[8,1], index: 5, kind: input, shape index: {}]
  %s6 = inlined_call_operand.hbm [shape: f32[8,512], index: 6, kind: output, shape index: {}]
  %s7 = sld [smem:[#allocation0]]
  $region57: #{tpu_custom_call.1} parent=0
    _
  %s9 = ssub.s32 1, %s7
  %s10 = scalar_select 0, %s9, %s7
  $region1: #{tpu_custom_call.1} parent=0
    #allocation2 [shape = 'u8[16384]{0}', space=vmem, size = 0x4000, scoped, tag = 'output window, operand 0']
    #allocation3 [shape = 's32[2]{0}', space=sflag, size = 0x8, scoped, tag = 'scoped memory for tpu_custom_call.1']
    %11 = vsyncpa [#allocation3], 0
    %s12 = scalar_lea.sflag [#allocation3], 1
    %13 = vsyncpa %s12, 0
    loop: start=0, step=1, limit=4
    $region2: #{tpu_custom_call.1} parent=1 // loop_pre_header
      _
    $region3: #{tpu_custom_call.1} parent=1 // loop_header
      %s15 = sphi 0, %s19
      %p16 = scmp.ge.s32.totalorder %s15, 4
      %s25 = sphi 0, %s27
      %s28 = sphi 0, %s25
      %s29 = sphi 0, %s28
      %s45 = sphi 0, %s29
      %s49 = sphi 0, %s49
      %s51 = sphi 0, %s49
      %s52 = sphi 0, %s51
      %s66 = sphi 0, %s52
      %s70 = sphi 0, %s70
      %s72 = sphi 0, %s70
      %s73 = sphi 0, %s72
      %s87 = sphi 0, %s73
      %s91 = sphi 0, %s91
      %s93 = sphi 0, %s91
      %s94 = sphi 0, %s93
      %s108 = sphi 0, %s94
      %s112 = sphi 0, %s112
      %s114 = sphi 0, %s112
      %s115 = sphi 0, %s114
      %s129 = sphi 0, %s115
      %s133 = sphi 0, %s133
      %s135 = sphi 0, %s133
      %s136 = sphi 0, %s135
      %s150 = sphi 0, %s136
      %s156 = sphi 0, %s158
      %s159 = sphi 0, %s156
      %s160 = sphi 0, %s159
      %s176 = sphi 0, %s160
    $region4: #{tpu_custom_call.1} parent=1 // loop_header_branch
      %18 = sbr.rel (%p16) target = $region8
    $region5: #{tpu_custom_call.1} parent=1 // loop_body
      %s20 = ssub.s32 %s15, 1
      %s21 = ssub.s32 %s15, 2
      %s22 = sadd.s32 %s15, 1
      %s23 = ssub.s32 %s15, %s22
      %p24 = scmp.eq.s32.totalorder %s23, 0
      %s26 = sadd.s32 %s25, 1
      %s27 = scalar_select %p24, %s25, %s26
      %p30 = pneg %p24
      %p31 = scmp.eq.s32.totalorder %s15, 1
      %p32 = por %p30, %p31
      %p33 = scmp.ne.s32.totalorder %s25, %s28
      %p34 = scmp.eq.s32.totalorder %s15, 0
      %p35 = por %p33, %p34
      %p36 = scmp.ne.s32.totalorder %s25, %s28
      %p37 = scmp.eq.s32.totalorder %s20, 1
      %p38 = por %p36, %p37
      %p39 = scmp.ne.s32.totalorder %s28, %s29
      %p40 = scmp.eq.s32.totalorder %s20, 0
      %p41 = por %p39, %p40
      %p42 = scmp.ne.s32.totalorder %s28, %s29
      %p43 = scmp.eq.s32.totalorder %s21, 1
      %p44 = por %p42, %p43
      %p46 = scmp.ne.s32.totalorder %s29, %s45
      %p47 = scmp.eq.s32.totalorder %s21, 0
      %p48 = por %p46, %p47
      %s50 = sadd.s32 %s49, 1
      %p53 = scmp.eq.s32.totalorder %s15, 1
      %p54 = scmp.ne.s32.totalorder %s49, %s51
      %p55 = scmp.eq.s32.totalorder %s15, 0
      %p56 = por %p54, %p55
      %p57 = scmp.ne.s32.totalorder %s49, %s51
      %p58 = scmp.eq.s32.totalorder %s20, 1
      %p59 = por %p57, %p58
      %p60 = scmp.ne.s32.totalorder %s51, %s52
      %p61 = scmp.eq.s32.totalorder %s20, 0
      %p62 = por %p60, %p61
      %p63 = scmp.ne.s32.totalorder %s51, %s52
      %p64 = scmp.eq.s32.totalorder %s21, 1
      %p65 = por %p63, %p64
      %p67 = scmp.ne.s32.totalorder %s52, %s66
      %p68 = scmp.eq.s32.totalorder %s21, 0
      %p69 = por %p67, %p68
      %s71 = sadd.s32 %s70, 1
      %p74 = scmp.eq.s32.totalorder %s15, 1
      %p75 = scmp.ne.s32.totalorder %s70, %s72
      %p76 = scmp.eq.s32.totalorder %s15, 0
      %p77 = por %p75, %p76
      %p78 = scmp.ne.s32.totalorder %s70, %s72
      %p79 = scmp.eq.s32.totalorder %s20, 1
      %p80 = por %p78, %p79
      %p81 = scmp.ne.s32.totalorder %s72, %s73
      %p82 = scmp.eq.s32.totalorder %s20, 0
      %p83 = por %p81, %p82
      %p84 = scmp.ne.s32.totalorder %s72, %s73
      %p85 = scmp.eq.s32.totalorder %s21, 1
      %p86 = por %p84, %p85
      %p88 = scmp.ne.s32.totalorder %s73, %s87
      %p89 = scmp.eq.s32.totalorder %s21, 0
      %p90 = por %p88, %p89
      %s92 = sadd.s32 %s91, 1
      %p95 = scmp.eq.s32.totalorder %s15, 1
      %p96 = scmp.ne.s32.totalorder %s91, %s93
      %p97 = scmp.eq.s32.totalorder %s15, 0
      %p98 = por %p96, %p97
      %p99 = scmp.ne.s32.totalorder %s91, %s93
      %p100 = scmp.eq.s32.totalorder %s20, 1
      %p101 = por %p99, %p100
      %p102 = scmp.ne.s32.totalorder %s93, %s94
      %p103 = scmp.eq.s32.totalorder %s20, 0
      %p104 = por %p102, %p103
      %p105 = scmp.ne.s32.totalorder %s93, %s94
      %p106 = scmp.eq.s32.totalorder %s21, 1
      %p107 = por %p105, %p106
      %p109 = scmp.ne.s32.totalorder %s94, %s108
      %p110 = scmp.eq.s32.totalorder %s21, 0
      %p111 = por %p109, %p110
      %s113 = sadd.s32 %s112, 1
      %p116 = scmp.eq.s32.totalorder %s15, 1
      %p117 = scmp.ne.s32.totalorder %s112, %s114
      %p118 = scmp.eq.s32.totalorder %s15, 0
      %p119 = por %p117, %p118
      %p120 = scmp.ne.s32.totalorder %s112, %s114
      %p121 = scmp.eq.s32.totalorder %s20, 1
      %p122 = por %p120, %p121
      %p123 = scmp.ne.s32.totalorder %s114, %s115
      %p124 = scmp.eq.s32.totalorder %s20, 0
      %p125 = por %p123, %p124
      %p126 = scmp.ne.s32.totalorder %s114, %s115
      %p127 = scmp.eq.s32.totalorder %s21, 1
      %p128 = por %p126, %p127
      %p130 = scmp.ne.s32.totalorder %s115, %s129
      %p131 = scmp.eq.s32.totalorder %s21, 0
      %p132 = por %p130, %p131
      %s134 = sadd.s32 %s133, 1
      %p137 = scmp.eq.s32.totalorder %s15, 1
      %p138 = scmp.ne.s32.totalorder %s133, %s135
      %p139 = scmp.eq.s32.totalorder %s15, 0
      %p140 = por %p138, %p139
      %p141 = scmp.ne.s32.totalorder %s133, %s135
      %p142 = scmp.eq.s32.totalorder %s20, 1
      %p143 = por %p141, %p142
      %p144 = scmp.ne.s32.totalorder %s135, %s136
      %p145 = scmp.eq.s32.totalorder %s20, 0
      %p146 = por %p144, %p145
      %p147 = scmp.ne.s32.totalorder %s135, %s136
      %p148 = scmp.eq.s32.totalorder %s21, 1
      %p149 = por %p147, %p148
      %p151 = scmp.ne.s32.totalorder %s136, %s150
      %p152 = scmp.eq.s32.totalorder %s21, 0
      %p153 = por %p151, %p152
      %s154 = ssub.s32 %s15, %s22
      %p155 = scmp.eq.s32.totalorder %s154, 0
      %s157 = sadd.s32 %s156, 1
      %s158 = scalar_select %p155, %s156, %s157
      %p161 = pneg %p155
      %p162 = scmp.eq.s32.totalorder %s15, 1
      %p163 = por %p161, %p162
      %p164 = scmp.ne.s32.totalorder %s156, %s159
      %p165 = scmp.eq.s32.totalorder %s15, 0
      %p166 = por %p164, %p165
      %p167 = scmp.ne.s32.totalorder %s156, %s159
      %p168 = scmp.eq.s32.totalorder %s20, 1
      %p169 = por %p167, %p168
      %p170 = scmp.ne.s32.totalorder %s159, %s160
      %p171 = scmp.eq.s32.totalorder %s20, 0
      %p172 = por %p170, %p171
      %p173 = scmp.ne.s32.totalorder %s159, %s160
      %p174 = scmp.eq.s32.totalorder %s21, 1
      %p175 = por %p173, %p174
      %p177 = scmp.ne.s32.totalorder %s160, %s176
      %p178 = scmp.eq.s32.totalorder %s21, 0
      %p179 = por %p177, %p178
      %p180 = scmp.le.s32.totalorder 1, %s15
      %p181 = scmp.lt.s32.totalorder %s15, 3
      %p182 = pnand %p180, %p181
      %p183 = pneg %p182
      // Predicated region
      $region9: #{tpu_custom_call.1} parent=5 // pred_check
        _
      $region10: #{tpu_custom_call.1} parent=5 // pred_check_branch
        %185 = sbr.rel (%p182) target = $region12
      $region11: #{tpu_custom_call.1} parent=5 // pred_region
        %s186 = ssub.s32 %s15, 1
        // Predicated region
        $region13: #{tpu_custom_call.1} parent=11 // pred_check
          %p187 = pneg %p62
        $region14: #{tpu_custom_call.1} parent=11 // pred_check_branch
          %189 = sbr.rel (%p187) target = $region16
        $region15: #{tpu_custom_call.1} parent=11 // pred_region
          _
        $region16: #{tpu_custom_call.1} parent=11 // pred_fallthru
          _
        // Predicated region
        $region17: #{tpu_custom_call.1} parent=11 // pred_check
          %p190 = pneg %p83
        $region18: #{tpu_custom_call.1} parent=11 // pred_check_branch
          %192 = sbr.rel (%p190) target = $region20
        $region19: #{tpu_custom_call.1} parent=11 // pred_region
          _
        $region20: #{tpu_custom_call.1} parent=11 // pred_fallthru
          _
        // Predicated region
        $region21: #{tpu_custom_call.1} parent=11 // pred_check
          %p193 = pneg %p104
        $region22: #{tpu_custom_call.1} parent=11 // pred_check_branch
          %195 = sbr.rel (%p193) target = $region24
        $region23: #{tpu_custom_call.1} parent=11 // pred_region
          _
        $region24: #{tpu_custom_call.1} parent=11 // pred_fallthru
          _
        // Predicated region
        $region25: #{tpu_custom_call.1} parent=11 // pred_check
          %p196 = pneg %p125
        $region26: #{tpu_custom_call.1} parent=11 // pred_check_branch
          %198 = sbr.rel (%p196) target = $region28
        $region27: #{tpu_custom_call.1} parent=11 // pred_region
          _
        $region28: #{tpu_custom_call.1} parent=11 // pred_fallthru
          _
        // Predicated region
        $region29: #{tpu_custom_call.1} parent=11 // pred_check
          %p199 = pneg %p146
        $region30: #{tpu_custom_call.1} parent=11 // pred_check_branch
          %201 = sbr.rel (%p199) target = $region32
        $region31: #{tpu_custom_call.1} parent=11 // pred_region
          _
        $region32: #{tpu_custom_call.1} parent=11 // pred_fallthru
          _
      $region12: #{tpu_custom_call.1} parent=5 // pred_fallthru
        _
      %p202 = scmp.lt.s32.totalorder %s15, 2
      // Predicated region
      $region33: #{tpu_custom_call.1} parent=5 // pred_check
        %p203 = pneg %p202
      $region34: #{tpu_custom_call.1} parent=5 // pred_check_branch
        %205 = sbr.rel (%p203) target = $region36
      $region35: #{tpu_custom_call.1} parent=5 // pred_region
        // Predicated region
        $region37: #{tpu_custom_call.1} parent=35 // pred_check
          %p206 = pneg %p35
        $region38: #{tpu_custom_call.1} parent=35 // pred_check_branch
          %208 = sbr.rel (%p206) target = $region40
        $region39: #{tpu_custom_call.1} parent=35 // pred_region
          %s209 = smul.u32 2, %s15
          %p210 = scmp.lt.s32.totalorder %s209, 3
          %s211 = scalar_select %p210, %s209, 3
          %s212 = smul.addr %s211, 8
          %s213 = scalar_lea.vmem %s0, %s212
          %s214 = smul.u32 2, %s15
        $region40: #{tpu_custom_call.1} parent=35 // pred_fallthru
          _
      $region36: #{tpu_custom_call.1} parent=5 // pred_fallthru
        _
      %p215 = scmp.le.s32.totalorder 1, %s15
      %p216 = scmp.lt.s32.totalorder %s15, 3
      %p217 = pnand %p215, %p216
      %p218 = pneg %p217
      // Predicated region
      $region41: #{tpu_custom_call.1} parent=5 // pred_check
        _
      $region42: #{tpu_custom_call.1} parent=5 // pred_check_branch
        %220 = sbr.rel (%p217) target = $region44
      $region43: #{tpu_custom_call.1} parent=5 // pred_region
        %s221 = ssub.s32 %s15, 1
        %s222 = smul.u32 2, %s20
        %p223 = scmp.lt.s32.totalorder %s222, 3
        %s224 = scalar_select %p223, %s222, 3
        %s225 = smul.addr %s224, 8
        %s226 = scalar_lea.vmem %s0, %s225
        %p227 = pneg %p41
        %p228 = pneg %p38
        %p229 = pneg %p62
        %p230 = pneg %p59
        %p231 = pneg %p83
        %p232 = pneg %p80
        %p233 = pneg %p104
        %p234 = pneg %p101
        %p235 = pneg %p125
        %p236 = pneg %p122
        %p237 = pneg %p146
        %p238 = pneg %p143
        %p239 = pneg %p172
        %p240 = pneg %p169
        %s241 = sand.u32 %s159, 1
        %s242 = scalar_lea.sflag [#allocation3], %s241
        %s243 = sand.u32 %s159, 1
        %s244 = smul.addr %s243, 16
        %s245 = scalar_lea.vmem [#allocation2], %s244
        %s246 = smul.u32 2, %s20
        %p247 = scmp.lt.s32.totalorder %s246, 3
        %s248 = scalar_select %p247, %s246, 3
        %s249 = smul.addr %s248, 8
        %s250 = scalar_lea.vmem %s0, %s249
        %s251 = smul.u32 2, %s20
        %s252 = smul.u32 2, %s20
        %v253 = vld [vmem:[%s250] sm:$0xff]
        %v254 = vld [vmem:[%s250 + $0x8] sm:$0xff]
        %v255 = vld [vmem:[%s1] ss:$8 sm:$0x3]
        %v257 = vlaneseq
        %v258 = vshrl.u32 %v257, 7
        %v259 = vsub.s32 0, %v258
        %v260 = vrot.slane %v255, %v259
        %v261 = vlaneseq
        %v262 = vshrl.u32 %v261, 7
        %v263 = vsub.s32 1, %v262
        %v264 = vrot.slane %v255, %v263
        %s267 = scalar_lea.vmem %s1, 1
        %v268 = vld [vmem:[%s267] ss:$8 sm:$0x3]
        %v270 = vlaneseq
        %v271 = vshrl.u32 %v270, 7
        %v272 = vsub.s32 0, %v271
        %v273 = vrot.slane %v268, %v272
        %v274 = vlaneseq
        %v275 = vshrl.u32 %v274, 7
        %v276 = vsub.s32 1, %v275
        %v277 = vrot.slane %v268, %v276
        %s280 = scalar_lea.vmem %s1, 2
        %v281 = vld [vmem:[%s280] ss:$8 sm:$0x3]
        %v283 = vlaneseq
        %v284 = vshrl.u32 %v283, 7
        %v285 = vsub.s32 0, %v284
        %v286 = vrot.slane %v281, %v285
        %v287 = vlaneseq
        %v288 = vshrl.u32 %v287, 7
        %v289 = vsub.s32 1, %v288
        %v290 = vrot.slane %v281, %v289
        %s293 = scalar_lea.vmem %s1, 3
        %v294 = vld [vmem:[%s293] ss:$8 sm:$0x3]
        %v296 = vlaneseq
        %v297 = vshrl.u32 %v296, 7
        %v298 = vsub.s32 0, %v297
        %v299 = vrot.slane %v294, %v298
        %v300 = vlaneseq
        %v301 = vshrl.u32 %v300, 7
        %v302 = vsub.s32 1, %v301
        %v303 = vrot.slane %v294, %v302
        %s306 = scalar_lea.vmem %s1, 4
        %v307 = vld [vmem:[%s306] ss:$8 sm:$0x3]
        %v309 = vlaneseq
        %v310 = vshrl.u32 %v309, 7
        %v311 = vsub.s32 0, %v310
        %v312 = vrot.slane %v307, %v311
        %v313 = vlaneseq
        %v314 = vshrl.u32 %v313, 7
        %v315 = vsub.s32 1, %v314
        %v316 = vrot.slane %v307, %v315
        %s319 = scalar_lea.vmem %s1, 5
        %v320 = vld [vmem:[%s319] ss:$8 sm:$0x3]
        %v322 = vlaneseq
        %v323 = vshrl.u32 %v322, 7
        %v324 = vsub.s32 0, %v323
        %v325 = vrot.slane %v320, %v324
        %v326 = vlaneseq
        %v327 = vshrl.u32 %v326, 7
        %v328 = vsub.s32 1, %v327
        %v329 = vrot.slane %v320, %v328
        %s332 = scalar_lea.vmem %s1, 6
        %v333 = vld [vmem:[%s332] ss:$8 sm:$0x3]
        %v335 = vlaneseq
        %v336 = vshrl.u32 %v335, 7
        %v337 = vsub.s32 0, %v336
        %v338 = vrot.slane %v333, %v337
        %v339 = vlaneseq
        %v340 = vshrl.u32 %v339, 7
        %v341 = vsub.s32 1, %v340
        %v342 = vrot.slane %v333, %v341
        %s345 = scalar_lea.vmem %s1, 7
        %v346 = vld [vmem:[%s345] ss:$8 sm:$0x3]
        %v348 = vlaneseq
        %v349 = vshrl.u32 %v348, 7
        %v350 = vsub.s32 0, %v349
        %v351 = vrot.slane %v346, %v350
        %v352 = vlaneseq
        %v353 = vshrl.u32 %v352, 7
        %v354 = vsub.s32 1, %v353
        %v355 = vrot.slane %v346, %v354
        %358 = vrot.lane.b32.xlu0 %v253, 17
        %v359 = vpop.permute.xlu0 %358
        %360 = vrot.lane.b32.xlu0 %v254, 17
        %v361 = vpop.permute.xlu0 %360
        %v362 = vlaneseq
        %v363 = vand.u32 %v362, 127
        %vm364 = vcmp.lt.s32.totalorder %v363, 17
        %v365 = vsel %vm364, %v359, %v361
        %v366 = vsel %vm364, %v361, %v359
        %v367 = vmul.f32 %v366, %v260
        %v368 = vmul.f32 %v365, %v264
        %v369 = vld [vmem:[%s2] sm:$0xff]
        %370 = vrot.lane.b32.xlu0 %v253, 16
        %v371 = vpop.permute.xlu0 %370
        %372 = vrot.lane.b32.xlu0 %v254, 16
        %v373 = vpop.permute.xlu0 %372
        %vm374 = vcmp.lt.s32.totalorder %v363, 16
        %v375 = vsel %vm374, %v371, %v373
        %v376 = vsel %vm374, %v373, %v371
        %v377 = vmul.f32 %v376, %v273
        %v378 = vmul.f32 %v375, %v277
        %s379 = scalar_lea.vmem %s2, 8
        %v380 = vld [vmem:[%s379] sm:$0xff]
        %vm381 = vcmask 64512
        %v383 = vsel %vm381, %v380, 0
        %385 = vmatprep.subr.mxu0 %v378
        %386 = vmatpush1.msra.mxu0 %v377
        %387 = vmatprep.subr.mxu0 0.0
        %388 = vmatpush1.msra.mxu0 0.0
        %389 = vmatprep.subr.mxu0 0.0
        %390 = vmatpush1.msra.mxu0 0.0
        %391 = vmatprep.subr.mxu0 0.0
        %392 = vmatpush1.msra.mxu0 0.0
        %393 = vmatprep.subr.mxu0 0.0
        %394 = vmatpush1.msra.mxu0 0.0
        %395 = vmatprep.subr.mxu0 0.0
        %396 = vmatpush1.msra.mxu0 0.0
        %397 = vmatprep.subr.mxu0 0.0
        %398 = vmatpush1.msra.mxu0 0.0
        %399 = vmatprep.subr.mxu0 0.0
        %400 = vmatpush1.msra.mxu0 0.0
        %401 = vmatprep.subr.mxu0 0.0
        %402 = vmatpush1.msra.mxu0 0.0
        %403 = vmatprep.subr.mxu0 0.0
        %404 = vmatpush1.msra.mxu0 0.0
        %405 = vmatprep.subr.mxu0 0.0
        %406 = vmatpush1.msra.mxu0 0.0
        %407 = vmatprep.subr.mxu0 0.0
        %408 = vmatpush1.msra.mxu0 0.0
        %409 = vmatprep.subr.mxu0 0.0
        %410 = vmatpush1.msra.mxu0 0.0
        %411 = vmatprep.subr.mxu0 0.0
        %412 = vmatpush1.msra.mxu0 0.0
        %413 = vmatprep.subr.mxu0 0.0
        %414 = vmatpush1.msra.mxu0 0.0
        %415 = vmatprep.subr.mxu0 0.0
        %416 = vmatpush1.msra.mxu0 0.0
        %417 = vmatprep.subr.mxu0 0.0
        %418 = vmatpush1.msra.mxu0 0.0
        %419 = vmatprep.subr.mxu0 0.0
        %420 = vmatpush1.msra.mxu0 0.0
        %421 = vmatprep.subr.mxu0 0.0
        %422 = vmatpush1.msra.mxu0 0.0
        %423 = vmatprep.subr.mxu0 0.0
        %424 = vmatpush1.msra.mxu0 0.0
        %425 = vmatprep.subr.mxu0 0.0
        %426 = vmatpush1.msra.mxu0 0.0
        %427 = vmatprep.subr.mxu0 0.0
        %428 = vmatpush1.msra.mxu0 0.0
        %429 = vmatprep.subr.mxu0 0.0
        %430 = vmatpush1.msra.mxu0 0.0
        %431 = vmatprep.subr.mxu0 0.0
        %432 = vmatpush1.msra.mxu0 0.0
        %433 = vmatprep.subr.mxu0 0.0
        %434 = vmatpush1.msra.mxu0 0.0
        %435 = vmatprep.subr.mxu0 0.0
        %436 = vmatpush1.msra.mxu0 0.0
        %437 = vmatprep.subr.mxu0 0.0
        %438 = vmatpush1.msra.mxu0 0.0
        %439 = vmatprep.subr.mxu0 0.0
        %440 = vmatpush1.msra.mxu0 0.0
        %441 = vmatprep.subr.mxu0 0.0
        %442 = vmatpush1.msra.mxu0 0.0
        %443 = vmatprep.subr.mxu0 0.0
        %444 = vmatpush1.msra.mxu0 0.0
        %445 = vmatprep.subr.mxu0 0.0
        %446 = vmatpush1.msra.mxu0 0.0
        %447 = vmatprep.subr.mxu0 0.0
        %448 = vmatpush1.msra.mxu0 0.0
        %449 = vmatprep.mubr.f32.mxu0 0.0
        %450 = vmatmul.mubr.f32.gmra.mrb[0].mxu0 %v383
        %v451 = vpop.f32.mrb[0].mxu0
        %v452 = vadd.f32 0.0, %v451
        %v453 = vpop.f32.mrb[0].mxu0
        %v454 = vadd.f32 0.0, %v453
        %455 = vdwg.mxu0
        %v457 = vsel %vm381, %v369, 0
        %459 = vmatprep.subr.mxu0 %v368
        %460 = vmatpush1.msra.mxu0 %v367
        %461 = vmatprep.subr.mxu0 0.0
        %462 = vmatpush1.msra.mxu0 0.0
        %463 = vmatprep.subr.mxu0 0.0
        %464 = vmatpush1.msra.mxu0 0.0
        %465 = vmatprep.subr.mxu0 0.0
        %466 = vmatpush1.msra.mxu0 0.0
        %467 = vmatprep.subr.mxu0 0.0
        %468 = vmatpush1.msra.mxu0 0.0
        %469 = vmatprep.subr.mxu0 0.0
        %470 = vmatpush1.msra.mxu0 0.0
        %471 = vmatprep.subr.mxu0 0.0
        %472 = vmatpush1.msra.mxu0 0.0
        %473 = vmatprep.subr.mxu0 0.0
        %474 = vmatpush1.msra.mxu0 0.0
        %475 = vmatprep.subr.mxu0 0.0
        %476 = vmatpush1.msra.mxu0 0.0
        %477 = vmatprep.subr.mxu0 0.0
        %478 = vmatpush1.msra.mxu0 0.0
        %479 = vmatprep.subr.mxu0 0.0
        %480 = vmatpush1.msra.mxu0 0.0
        %481 = vmatprep.subr.mxu0 0.0
        %482 = vmatpush1.msra.mxu0 0.0
        %483 = vmatprep.subr.mxu0 0.0
        %484 = vmatpush1.msra.mxu0 0.0
        %485 = vmatprep.subr.mxu0 0.0
        %486 = vmatpush1.msra.mxu0 0.0
        %487 = vmatprep.subr.mxu0 0.0
        %488 = vmatpush1.msra.mxu0 0.0
        %489 = vmatprep.subr.mxu0 0.0
        %490 = vmatpush1.msra.mxu0 0.0
        %491 = vmatprep.subr.mxu0 0.0
        %492 = vmatpush1.msra.mxu0 0.0
        %493 = vmatprep.subr.mxu0 0.0
        %494 = vmatpush1.msra.mxu0 0.0
        %495 = vmatprep.subr.mxu0 0.0
        %496 = vmatpush1.msra.mxu0 0.0
        %497 = vmatprep.subr.mxu0 0.0
        %498 = vmatpush1.msra.mxu0 0.0
        %499 = vmatprep.subr.mxu0 0.0
        %500 = vmatpush1.msra.mxu0 0.0
        %501 = vmatprep.subr.mxu0 0.0
        %502 = vmatpush1.msra.mxu0 0.0
        %503 = vmatprep.subr.mxu0 0.0
        %504 = vmatpush1.msra.mxu0 0.0
        %505 = vmatprep.subr.mxu0 0.0
        %506 = vmatpush1.msra.mxu0 0.0
        %507 = vmatprep.subr.mxu0 0.0
        %508 = vmatpush1.msra.mxu0 0.0
        %509 = vmatprep.subr.mxu0 0.0
        %510 = vmatpush1.msra.mxu0 0.0
        %511 = vmatprep.subr.mxu0 0.0
        %512 = vmatpush1.msra.mxu0 0.0
        %513 = vmatprep.subr.mxu0 0.0
        %514 = vmatpush1.msra.mxu0 0.0
        %515 = vmatprep.subr.mxu0 0.0
        %516 = vmatpush1.msra.mxu0 0.0
        %517 = vmatprep.subr.mxu0 0.0
        %518 = vmatpush1.msra.mxu0 0.0
        %519 = vmatprep.subr.mxu0 0.0
        %520 = vmatpush1.msra.mxu0 0.0
        %521 = vmatprep.subr.mxu0 0.0
        %522 = vmatpush1.msra.mxu0 0.0
        %523 = vmatprep.mubr.f32.mxu0 0.0
        %524 = vmatmul.mubr.f32.gmra.mrb[0].mxu0 %v457
        %v525 = vpop.f32.mrb[0].mxu0
        %v526 = vadd.f32 %v452, %v525
        %v527 = vpop.f32.mrb[0].mxu0
        %v528 = vadd.f32 %v454, %v527
        %529 = vdwg.mxu0
        %530 = vrot.lane.b32.xlu0 %v253, 15
        %v531 = vpop.permute.xlu0 %530
        %532 = vrot.lane.b32.xlu0 %v254, 15
        %v533 = vpop.permute.xlu0 %532
        %vm534 = vcmp.lt.s32.totalorder %v363, 15
        %v535 = vsel %vm534, %v531, %v533
        %v536 = vsel %vm534, %v533, %v531
        %v537 = vmul.f32 %v536, %v286
        %v538 = vmul.f32 %v535, %v290
        %s539 = scalar_lea.vmem %s2, 16
        %v540 = vld [vmem:[%s539] sm:$0xff]
        %v542 = vsel %vm381, %v540, 0
        %544 = vmatprep.subr.mxu0 %v538
        %545 = vmatpush1.msra.mxu0 %v537
        %546 = vmatprep.subr.mxu0 0.0
        %547 = vmatpush1.msra.mxu0 0.0
        %548 = vmatprep.subr.mxu0 0.0
        %549 = vmatpush1.msra.mxu0 0.0
        %550 = vmatprep.subr.mxu0 0.0
        %551 = vmatpush1.msra.mxu0 0.0
        %552 = vmatprep.subr.mxu0 0.0
        %553 = vmatpush1.msra.mxu0 0.0
        %554 = vmatprep.subr.mxu0 0.0
        %555 = vmatpush1.msra.mxu0 0.0
        %556 = vmatprep.subr.mxu0 0.0
        %557 = vmatpush1.msra.mxu0 0.0
        %558 = vmatprep.subr.mxu0 0.0
        %559 = vmatpush1.msra.mxu0 0.0
        %560 = vmatprep.subr.mxu0 0.0
        %561 = vmatpush1.msra.mxu0 0.0
        %562 = vmatprep.subr.mxu0 0.0
        %563 = vmatpush1.msra.mxu0 0.0
        %564 = vmatprep.subr.mxu0 0.0
        %565 = vmatpush1.msra.mxu0 0.0
        %566 = vmatprep.subr.mxu0 0.0
        %567 = vmatpush1.msra.mxu0 0.0
        %568 = vmatprep.subr.mxu0 0.0
        %569 = vmatpush1.msra.mxu0 0.0
        %570 = vmatprep.subr.mxu0 0.0
        %571 = vmatpush1.msra.mxu0 0.0
        %572 = vmatprep.subr.mxu0 0.0
        %573 = vmatpush1.msra.mxu0 0.0
        %574 = vmatprep.subr.mxu0 0.0
        %575 = vmatpush1.msra.mxu0 0.0
        %576 = vmatprep.subr.mxu0 0.0
        %577 = vmatpush1.msra.mxu0 0.0
        %578 = vmatprep.subr.mxu0 0.0
        %579 = vmatpush1.msra.mxu0 0.0
        %580 = vmatprep.subr.mxu0 0.0
        %581 = vmatpush1.msra.mxu0 0.0
        %582 = vmatprep.subr.mxu0 0.0
        %583 = vmatpush1.msra.mxu0 0.0
        %584 = vmatprep.subr.mxu0 0.0
        %585 = vmatpush1.msra.mxu0 0.0
        %586 = vmatprep.subr.mxu0 0.0
        %587 = vmatpush1.msra.mxu0 0.0
        %588 = vmatprep.subr.mxu0 0.0
        %589 = vmatpush1.msra.mxu0 0.0
        %590 = vmatprep.subr.mxu0 0.0
        %591 = vmatpush1.msra.mxu0 0.0
        %592 = vmatprep.subr.mxu0 0.0
        %593 = vmatpush1.msra.mxu0 0.0
        %594 = vmatprep.subr.mxu0 0.0
        %595 = vmatpush1.msra.mxu0 0.0
        %596 = vmatprep.subr.mxu0 0.0
        %597 = vmatpush1.msra.mxu0 0.0
        %598 = vmatprep.subr.mxu0 0.0
        %599 = vmatpush1.msra.mxu0 0.0
        %600 = vmatprep.subr.mxu0 0.0
        %601 = vmatpush1.msra.mxu0 0.0
        %602 = vmatprep.subr.mxu0 0.0
        %603 = vmatpush1.msra.mxu0 0.0
        %604 = vmatprep.subr.mxu0 0.0
        %605 = vmatpush1.msra.mxu0 0.0
        %606 = vmatprep.subr.mxu0 0.0
        %607 = vmatpush1.msra.mxu0 0.0
        %608 = vmatprep.mubr.f32.mxu0 0.0
        %609 = vmatmul.mubr.f32.gmra.mrb[0].mxu0 %v542
        %v610 = vpop.f32.mrb[0].mxu0
        %v611 = vadd.f32 0.0, %v610
        %v612 = vpop.f32.mrb[0].mxu0
        %v613 = vadd.f32 0.0, %v612
        %614 = vdwg.mxu0
        %v615 = vadd.f32 %v526, %v611
        %v616 = vadd.f32 %v528, %v613
        %617 = vrot.lane.b32.xlu0 %v253, 1
        %v618 = vpop.permute.xlu0 %617
        %619 = vrot.lane.b32.xlu0 %v254, 1
        %v620 = vpop.permute.xlu0 %619
        %vm621 = vcmp.lt.s32.totalorder %v363, 1
        %v622 = vsel %vm621, %v618, %v620
        %v623 = vsel %vm621, %v620, %v618
        %v624 = vmul.f32 %v623, %v299
        %v625 = vmul.f32 %v622, %v303
        %s626 = scalar_lea.vmem %s2, 24
        %v627 = vld [vmem:[%s626] sm:$0xff]
        %v629 = vsel %vm381, %v627, 0
        %631 = vmatprep.subr.mxu0 %v625
        %632 = vmatpush1.msra.mxu0 %v624
        %633 = vmatprep.subr.mxu0 0.0
        %634 = vmatpush1.msra.mxu0 0.0
        %635 = vmatprep.subr.mxu0 0.0
        %636 = vmatpush1.msra.mxu0 0.0
        %637 = vmatprep.subr.mxu0 0.0
        %638 = vmatpush1.msra.mxu0 0.0
        %639 = vmatprep.subr.mxu0 0.0
        %640 = vmatpush1.msra.mxu0 0.0
        %641 = vmatprep.subr.mxu0 0.0
        %642 = vmatpush1.msra.mxu0 0.0
        %643 = vmatprep.subr.mxu0 0.0
        %644 = vmatpush1.msra.mxu0 0.0
        %645 = vmatprep.subr.mxu0 0.0
        %646 = vmatpush1.msra.mxu0 0.0
        %647 = vmatprep.subr.mxu0 0.0
        %648 = vmatpush1.msra.mxu0 0.0
        %649 = vmatprep.subr.mxu0 0.0
        %650 = vmatpush1.msra.mxu0 0.0
        %651 = vmatprep.subr.mxu0 0.0
        %652 = vmatpush1.msra.mxu0 0.0
        %653 = vmatprep.subr.mxu0 0.0
        %654 = vmatpush1.msra.mxu0 0.0
        %655 = vmatprep.subr.mxu0 0.0
        %656 = vmatpush1.msra.mxu0 0.0
        %657 = vmatprep.subr.mxu0 0.0
        %658 = vmatpush1.msra.mxu0 0.0
        %659 = vmatprep.subr.mxu0 0.0
        %660 = vmatpush1.msra.mxu0 0.0
        %661 = vmatprep.subr.mxu0 0.0
        %662 = vmatpush1.msra.mxu0 0.0
        %663 = vmatprep.subr.mxu0 0.0
        %664 = vmatpush1.msra.mxu0 0.0
        %665 = vmatprep.subr.mxu0 0.0
        %666 = vmatpush1.msra.mxu0 0.0
        %667 = vmatprep.subr.mxu0 0.0
        %668 = vmatpush1.msra.mxu0 0.0
        %669 = vmatprep.subr.mxu0 0.0
        %670 = vmatpush1.msra.mxu0 0.0
        %671 = vmatprep.subr.mxu0 0.0
        %672 = vmatpush1.msra.mxu0 0.0
        %673 = vmatprep.subr.mxu0 0.0
        %674 = vmatpush1.msra.mxu0 0.0
        %675 = vmatprep.subr.mxu0 0.0
        %676 = vmatpush1.msra.mxu0 0.0
        %677 = vmatprep.subr.mxu0 0.0
        %678 = vmatpush1.msra.mxu0 0.0
        %679 = vmatprep.subr.mxu0 0.0
        %680 = vmatpush1.msra.mxu0 0.0
        %681 = vmatprep.subr.mxu0 0.0
        %682 = vmatpush1.msra.mxu0 0.0
        %683 = vmatprep.subr.mxu0 0.0
        %684 = vmatpush1.msra.mxu0 0.0
        %685 = vmatprep.subr.mxu0 0.0
        %686 = vmatpush1.msra.mxu0 0.0
        %687 = vmatprep.subr.mxu0 0.0
        %688 = vmatpush1.msra.mxu0 0.0
        %689 = vmatprep.subr.mxu0 0.0
        %690 = vmatpush1.msra.mxu0 0.0
        %691 = vmatprep.subr.mxu0 0.0
        %692 = vmatpush1.msra.mxu0 0.0
        %693 = vmatprep.subr.mxu0 0.0
        %694 = vmatpush1.msra.mxu0 0.0
        %695 = vmatprep.mubr.f32.mxu0 0.0
        %696 = vmatmul.mubr.f32.gmra.mrb[0].mxu0 %v629
        %v697 = vpop.f32.mrb[0].mxu0
        %v698 = vadd.f32 0.0, %v697
        %v699 = vpop.f32.mrb[0].mxu0
        %v700 = vadd.f32 0.0, %v699
        %701 = vdwg.mxu0
        %v702 = vadd.f32 %v615, %v698
        %v703 = vadd.f32 %v616, %v700
        %s704 = scalar_lea.vmem %s2, 32
        %v705 = vld [vmem:[%s704] sm:$0xff]
        %v707 = vsel %vm381, %v705, 0
        %709 = vmatprep.subr.mxu0 %v254
        %710 = vmatpush1.msra.mxu0 %v253
        %711 = vmatprep.subr.mxu0 0.0
        %712 = vmatpush1.msra.mxu0 0.0
        %713 = vmatprep.subr.mxu0 0.0
        %714 = vmatpush1.msra.mxu0 0.0
        %715 = vmatprep.subr.mxu0 0.0
        %716 = vmatpush1.msra.mxu0 0.0
        %717 = vmatprep.subr.mxu0 0.0
        %718 = vmatpush1.msra.mxu0 0.0
        %719 = vmatprep.subr.mxu0 0.0
        %720 = vmatpush1.msra.mxu0 0.0
        %721 = vmatprep.subr.mxu0 0.0
        %722 = vmatpush1.msra.mxu0 0.0
        %723 = vmatprep.subr.mxu0 0.0
        %724 = vmatpush1.msra.mxu0 0.0
        %725 = vmatprep.subr.mxu0 0.0
        %726 = vmatpush1.msra.mxu0 0.0
        %727 = vmatprep.subr.mxu0 0.0
        %728 = vmatpush1.msra.mxu0 0.0
        %729 = vmatprep.subr.mxu0 0.0
        %730 = vmatpush1.msra.mxu0 0.0
        %731 = vmatprep.subr.mxu0 0.0
        %732 = vmatpush1.msra.mxu0 0.0
        %733 = vmatprep.subr.mxu0 0.0
        %734 = vmatpush1.msra.mxu0 0.0
        %735 = vmatprep.subr.mxu0 0.0
        %736 = vmatpush1.msra.mxu0 0.0
        %737 = vmatprep.subr.mxu0 0.0
        %738 = vmatpush1.msra.mxu0 0.0
        %739 = vmatprep.subr.mxu0 0.0
        %740 = vmatpush1.msra.mxu0 0.0
        %741 = vmatprep.subr.mxu0 0.0
        %742 = vmatpush1.msra.mxu0 0.0
        %743 = vmatprep.subr.mxu0 0.0
        %744 = vmatpush1.msra.mxu0 0.0
        %745 = vmatprep.subr.mxu0 0.0
        %746 = vmatpush1.msra.mxu0 0.0
        %747 = vmatprep.subr.mxu0 0.0
        %748 = vmatpush1.msra.mxu0 0.0
        %749 = vmatprep.subr.mxu0 0.0
        %750 = vmatpush1.msra.mxu0 0.0
        %751 = vmatprep.subr.mxu0 0.0
        %752 = vmatpush1.msra.mxu0 0.0
        %753 = vmatprep.subr.mxu0 0.0
        %754 = vmatpush1.msra.mxu0 0.0
        %755 = vmatprep.subr.mxu0 0.0
        %756 = vmatpush1.msra.mxu0 0.0
        %757 = vmatprep.subr.mxu0 0.0
        %758 = vmatpush1.msra.mxu0 0.0
        %759 = vmatprep.subr.mxu0 0.0
        %760 = vmatpush1.msra.mxu0 0.0
        %761 = vmatprep.subr.mxu0 0.0
        %762 = vmatpush1.msra.mxu0 0.0
        %763 = vmatprep.subr.mxu0 0.0
        %764 = vmatpush1.msra.mxu0 0.0
        %765 = vmatprep.subr.mxu0 0.0
        %766 = vmatpush1.msra.mxu0 0.0
        %767 = vmatprep.subr.mxu0 0.0
        %768 = vmatpush1.msra.mxu0 0.0
        %769 = vmatprep.subr.mxu0 0.0
        %770 = vmatpush1.msra.mxu0 0.0
        %771 = vmatprep.subr.mxu0 0.0
        %772 = vmatpush1.msra.mxu0 0.0
        %773 = vmatprep.mubr.f32.mxu0 0.0
        %774 = vmatmul.mubr.f32.gmra.mrb[0].mxu0 %v707
        %v775 = vpop.f32.mrb[0].mxu0
        %v776 = vadd.f32 0.0, %v775
        %v777 = vpop.f32.mrb[0].mxu0
        %v778 = vadd.f32 0.0, %v777
        %779 = vdwg.mxu0
        %v780 = vadd.f32 %v702, %v776
        %v781 = vadd.f32 %v703, %v778
        %782 = vrot.lane.b32.xlu0 %v253, 127
        %v783 = vpop.permute.xlu0 %782
        %784 = vrot.lane.b32.xlu0 %v254, 127
        %v785 = vpop.permute.xlu0 %784
        %vm786 = vcmp.lt.s32.totalorder %v363, 127
        %v787 = vsel %vm786, %v783, %v785
        %v788 = vsel %vm786, %v785, %v783
        %v789 = vmul.f32 %v787, %v312
        %v790 = vmul.f32 %v788, %v316
        %s791 = scalar_lea.vmem %s2, 40
        %v792 = vld [vmem:[%s791] sm:$0xff]
        %v794 = vsel %vm381, %v792, 0
        %796 = vmatprep.subr.mxu0 %v790
        %797 = vmatpush1.msra.mxu0 %v789
        %798 = vmatprep.subr.mxu0 0.0
        %799 = vmatpush1.msra.mxu0 0.0
        %800 = vmatprep.subr.mxu0 0.0
        %801 = vmatpush1.msra.mxu0 0.0
        %802 = vmatprep.subr.mxu0 0.0
        %803 = vmatpush1.msra.mxu0 0.0
        %804 = vmatprep.subr.mxu0 0.0
        %805 = vmatpush1.msra.mxu0 0.0
        %806 = vmatprep.subr.mxu0 0.0
        %807 = vmatpush1.msra.mxu0 0.0
        %808 = vmatprep.subr.mxu0 0.0
        %809 = vmatpush1.msra.mxu0 0.0
        %810 = vmatprep.subr.mxu0 0.0
        %811 = vmatpush1.msra.mxu0 0.0
        %812 = vmatprep.subr.mxu0 0.0
        %813 = vmatpush1.msra.mxu0 0.0
        %814 = vmatprep.subr.mxu0 0.0
        %815 = vmatpush1.msra.mxu0 0.0
        %816 = vmatprep.subr.mxu0 0.0
        %817 = vmatpush1.msra.mxu0 0.0
        %818 = vmatprep.subr.mxu0 0.0
        %819 = vmatpush1.msra.mxu0 0.0
        %820 = vmatprep.subr.mxu0 0.0
        %821 = vmatpush1.msra.mxu0 0.0
        %822 = vmatprep.subr.mxu0 0.0
        %823 = vmatpush1.msra.mxu0 0.0
        %824 = vmatprep.subr.mxu0 0.0
        %825 = vmatpush1.msra.mxu0 0.0
        %826 = vmatprep.subr.mxu0 0.0
        %827 = vmatpush1.msra.mxu0 0.0
        %828 = vmatprep.subr.mxu0 0.0
        %829 = vmatpush1.msra.mxu0 0.0
        %830 = vmatprep.subr.mxu0 0.0
        %831 = vmatpush1.msra.mxu0 0.0
        %832 = vmatprep.subr.mxu0 0.0
        %833 = vmatpush1.msra.mxu0 0.0
        %834 = vmatprep.subr.mxu0 0.0
        %835 = vmatpush1.msra.mxu0 0.0
        %836 = vmatprep.subr.mxu0 0.0
        %837 = vmatpush1.msra.mxu0 0.0
        %838 = vmatprep.subr.mxu0 0.0
        %839 = vmatpush1.msra.mxu0 0.0
        %840 = vmatprep.subr.mxu0 0.0
        %841 = vmatpush1.msra.mxu0 0.0
        %842 = vmatprep.subr.mxu0 0.0
        %843 = vmatpush1.msra.mxu0 0.0
        %844 = vmatprep.subr.mxu0 0.0
        %845 = vmatpush1.msra.mxu0 0.0
        %846 = vmatprep.subr.mxu0 0.0
        %847 = vmatpush1.msra.mxu0 0.0
        %848 = vmatprep.subr.mxu0 0.0
        %849 = vmatpush1.msra.mxu0 0.0
        %850 = vmatprep.subr.mxu0 0.0
        %851 = vmatpush1.msra.mxu0 0.0
        %852 = vmatprep.subr.mxu0 0.0
        %853 = vmatpush1.msra.mxu0 0.0
        %854 = vmatprep.subr.mxu0 0.0
        %855 = vmatpush1.msra.mxu0 0.0
        %856 = vmatprep.subr.mxu0 0.0
        %857 = vmatpush1.msra.mxu0 0.0
        %858 = vmatprep.subr.mxu0 0.0
        %859 = vmatpush1.msra.mxu0 0.0
        %860 = vmatprep.mubr.f32.mxu0 0.0
        %861 = vmatmul.mubr.f32.gmra.mrb[0].mxu0 %v794
        %v862 = vpop.f32.mrb[0].mxu0
        %v863 = vadd.f32 0.0, %v862
        %v864 = vpop.f32.mrb[0].mxu0
        %v865 = vadd.f32 0.0, %v864
        %866 = vdwg.mxu0
        %v867 = vadd.f32 %v780, %v863
        %v868 = vadd.f32 %v781, %v865
        %869 = vrot.lane.b32.xlu0 %v253, 113
        %v870 = vpop.permute.xlu0 %869
        %871 = vrot.lane.b32.xlu0 %v254, 113
        %v872 = vpop.permute.xlu0 %871
        %vm873 = vcmp.lt.s32.totalorder %v363, 113
        %v874 = vsel %vm873, %v870, %v872
        %v875 = vsel %vm873, %v872, %v870
        %v876 = vmul.f32 %v874, %v325
        %v877 = vmul.f32 %v875, %v329
        %s878 = scalar_lea.vmem %s2, 48
        %v879 = vld [vmem:[%s878] sm:$0xff]
        %v881 = vsel %vm381, %v879, 0
        %883 = vmatprep.subr.mxu0 %v877
        %884 = vmatpush1.msra.mxu0 %v876
        %885 = vmatprep.subr.mxu0 0.0
        %886 = vmatpush1.msra.mxu0 0.0
        %887 = vmatprep.subr.mxu0 0.0
        %888 = vmatpush1.msra.mxu0 0.0
        %889 = vmatprep.subr.mxu0 0.0
        %890 = vmatpush1.msra.mxu0 0.0
        %891 = vmatprep.subr.mxu0 0.0
        %892 = vmatpush1.msra.mxu0 0.0
        %893 = vmatprep.subr.mxu0 0.0
        %894 = vmatpush1.msra.mxu0 0.0
        %895 = vmatprep.subr.mxu0 0.0
        %896 = vmatpush1.msra.mxu0 0.0
        %897 = vmatprep.subr.mxu0 0.0
        %898 = vmatpush1.msra.mxu0 0.0
        %899 = vmatprep.subr.mxu0 0.0
        %900 = vmatpush1.msra.mxu0 0.0
        %901 = vmatprep.subr.mxu0 0.0
        %902 = vmatpush1.msra.mxu0 0.0
        %903 = vmatprep.subr.mxu0 0.0
        %904 = vmatpush1.msra.mxu0 0.0
        %905 = vmatprep.subr.mxu0 0.0
        %906 = vmatpush1.msra.mxu0 0.0
        %907 = vmatprep.subr.mxu0 0.0
        %908 = vmatpush1.msra.mxu0 0.0
        %909 = vmatprep.subr.mxu0 0.0
        %910 = vmatpush1.msra.mxu0 0.0
        %911 = vmatprep.subr.mxu0 0.0
        %912 = vmatpush1.msra.mxu0 0.0
        %913 = vmatprep.subr.mxu0 0.0
        %914 = vmatpush1.msra.mxu0 0.0
        %915 = vmatprep.subr.mxu0 0.0
        %916 = vmatpush1.msra.mxu0 0.0
        %917 = vmatprep.subr.mxu0 0.0
        %918 = vmatpush1.msra.mxu0 0.0
        %919 = vmatprep.subr.mxu0 0.0
        %920 = vmatpush1.msra.mxu0 0.0
        %921 = vmatprep.subr.mxu0 0.0
        %922 = vmatpush1.msra.mxu0 0.0
        %923 = vmatprep.subr.mxu0 0.0
        %924 = vmatpush1.msra.mxu0 0.0
        %925 = vmatprep.subr.mxu0 0.0
        %926 = vmatpush1.msra.mxu0 0.0
        %927 = vmatprep.subr.mxu0 0.0
        %928 = vmatpush1.msra.mxu0 0.0
        %929 = vmatprep.subr.mxu0 0.0
        %930 = vmatpush1.msra.mxu0 0.0
        %931 = vmatprep.subr.mxu0 0.0
        %932 = vmatpush1.msra.mxu0 0.0
        %933 = vmatprep.subr.mxu0 0.0
        %934 = vmatpush1.msra.mxu0 0.0
        %935 = vmatprep.subr.mxu0 0.0
        %936 = vmatpush1.msra.mxu0 0.0
        %937 = vmatprep.subr.mxu0 0.0
        %938 = vmatpush1.msra.mxu0 0.0
        %939 = vmatprep.subr.mxu0 0.0
        %940 = vmatpush1.msra.mxu0 0.0
        %941 = vmatprep.subr.mxu0 0.0
        %942 = vmatpush1.msra.mxu0 0.0
        %943 = vmatprep.subr.mxu0 0.0
        %944 = vmatpush1.msra.mxu0 0.0
        %945 = vmatprep.subr.mxu0 0.0
        %946 = vmatpush1.msra.mxu0 0.0
        %947 = vmatprep.mubr.f32.mxu0 0.0
        %948 = vmatmul.mubr.f32.gmra.mrb[0].mxu0 %v881
        %v949 = vpop.f32.mrb[0].mxu0
        %v950 = vadd.f32 0.0, %v949
        %v951 = vpop.f32.mrb[0].mxu0
        %v952 = vadd.f32 0.0, %v951
        %953 = vdwg.mxu0
        %v954 = vadd.f32 %v867, %v950
        %v955 = vadd.f32 %v868, %v952
        %956 = vrot.lane.b32.xlu0 %v253, 112
        %v957 = vpop.permute.xlu0 %956
        %958 = vrot.lane.b32.xlu0 %v254, 112
        %v959 = vpop.permute.xlu0 %958
        %vm960 = vcmp.lt.s32.totalorder %v363, 112
        %v961 = vsel %vm960, %v957, %v959
        %v962 = vsel %vm960, %v959, %v957
        %v963 = vmul.f32 %v961, %v338
        %v964 = vmul.f32 %v962, %v342
        %s965 = scalar_lea.vmem %s2, 56
        %v966 = vld [vmem:[%s965] sm:$0xff]
        %v968 = vsel %vm381, %v966, 0
        %970 = vmatprep.subr.mxu0 %v964
        %971 = vmatpush1.msra.mxu0 %v963
        %972 = vmatprep.subr.mxu0 0.0
        %973 = vmatpush1.msra.mxu0 0.0
        %974 = vmatprep.subr.mxu0 0.0
        %975 = vmatpush1.msra.mxu0 0.0
        %976 = vmatprep.subr.mxu0 0.0
        %977 = vmatpush1.msra.mxu0 0.0
        %978 = vmatprep.subr.mxu0 0.0
        %979 = vmatpush1.msra.mxu0 0.0
        %980 = vmatprep.subr.mxu0 0.0
        %981 = vmatpush1.msra.mxu0 0.0
        %982 = vmatprep.subr.mxu0 0.0
        %983 = vmatpush1.msra.mxu0 0.0
        %984 = vmatprep.subr.mxu0 0.0
        %985 = vmatpush1.msra.mxu0 0.0
        %986 = vmatprep.subr.mxu0 0.0
        %987 = vmatpush1.msra.mxu0 0.0
        %988 = vmatprep.subr.mxu0 0.0
        %989 = vmatpush1.msra.mxu0 0.0
        %990 = vmatprep.subr.mxu0 0.0
        %991 = vmatpush1.msra.mxu0 0.0
        %992 = vmatprep.subr.mxu0 0.0
        %993 = vmatpush1.msra.mxu0 0.0
        %994 = vmatprep.subr.mxu0 0.0
        %995 = vmatpush1.msra.mxu0 0.0
        %996 = vmatprep.subr.mxu0 0.0
        %997 = vmatpush1.msra.mxu0 0.0
        %998 = vmatprep.subr.mxu0 0.0
        %999 = vmatpush1.msra.mxu0 0.0
        %1000 = vmatprep.subr.mxu0 0.0
        %1001 = vmatpush1.msra.mxu0 0.0
        %1002 = vmatprep.subr.mxu0 0.0
        %1003 = vmatpush1.msra.mxu0 0.0
        %1004 = vmatprep.subr.mxu0 0.0
        %1005 = vmatpush1.msra.mxu0 0.0
        %1006 = vmatprep.subr.mxu0 0.0
        %1007 = vmatpush1.msra.mxu0 0.0
        %1008 = vmatprep.subr.mxu0 0.0
        %1009 = vmatpush1.msra.mxu0 0.0
        %1010 = vmatprep.subr.mxu0 0.0
        %1011 = vmatpush1.msra.mxu0 0.0
        %1012 = vmatprep.subr.mxu0 0.0
        %1013 = vmatpush1.msra.mxu0 0.0
        %1014 = vmatprep.subr.mxu0 0.0
        %1015 = vmatpush1.msra.mxu0 0.0
        %1016 = vmatprep.subr.mxu0 0.0
        %1017 = vmatpush1.msra.mxu0 0.0
        %1018 = vmatprep.subr.mxu0 0.0
        %1019 = vmatpush1.msra.mxu0 0.0
        %1020 = vmatprep.subr.mxu0 0.0
        %1021 = vmatpush1.msra.mxu0 0.0
        %1022 = vmatprep.subr.mxu0 0.0
        %1023 = vmatpush1.msra.mxu0 0.0
        %1024 = vmatprep.subr.mxu0 0.0
        %1025 = vmatpush1.msra.mxu0 0.0
        %1026 = vmatprep.subr.mxu0 0.0
        %1027 = vmatpush1.msra.mxu0 0.0
        %1028 = vmatprep.subr.mxu0 0.0
        %1029 = vmatpush1.msra.mxu0 0.0
        %1030 = vmatprep.subr.mxu0 0.0
        %1031 = vmatpush1.msra.mxu0 0.0
        %1032 = vmatprep.subr.mxu0 0.0
        %1033 = vmatpush1.msra.mxu0 0.0
        %1034 = vmatprep.mubr.f32.mxu0 0.0
        %1035 = vmatmul.mubr.f32.gmra.mrb[0].mxu0 %v968
        %v1036 = vpop.f32.mrb[0].mxu0
        %v1037 = vadd.f32 0.0, %v1036
        %v1038 = vpop.f32.mrb[0].mxu0
        %v1039 = vadd.f32 0.0, %v1038
        %1040 = vdwg.mxu0
        %v1041 = vadd.f32 %v954, %v1037
        %v1042 = vadd.f32 %v955, %v1039
        %1043 = vrot.lane.b32.xlu0 %v253, 111
        %v1044 = vpop.permute.xlu0 %1043
        %1045 = vrot.lane.b32.xlu0 %v254, 111
        %v1046 = vpop.permute.xlu0 %1045
        %vm1047 = vcmp.lt.s32.totalorder %v363, 111
        %v1048 = vsel %vm1047, %v1044, %v1046
        %v1049 = vsel %vm1047, %v1046, %v1044
        %v1050 = vmul.f32 %v1048, %v351
        %v1051 = vmul.f32 %v1049, %v355
        %s1052 = scalar_lea.vmem %s2, 64
        %v1053 = vld [vmem:[%s1052] sm:$0xff]
        %v1055 = vsel %vm381, %v1053, 0
        %1057 = vmatprep.subr.mxu0 %v1051
        %1058 = vmatpush1.msra.mxu0 %v1050
        %1059 = vmatprep.subr.mxu0 0.0
        %1060 = vmatpush1.msra.mxu0 0.0
        %1061 = vmatprep.subr.mxu0 0.0
        %1062 = vmatpush1.msra.mxu0 0.0
        %1063 = vmatprep.subr.mxu0 0.0
        %1064 = vmatpush1.msra.mxu0 0.0
        %1065 = vmatprep.subr.mxu0 0.0
        %1066 = vmatpush1.msra.mxu0 0.0
        %1067 = vmatprep.subr.mxu0 0.0
        %1068 = vmatpush1.msra.mxu0 0.0
        %1069 = vmatprep.subr.mxu0 0.0
        %1070 = vmatpush1.msra.mxu0 0.0
        %1071 = vmatprep.subr.mxu0 0.0
        %1072 = vmatpush1.msra.mxu0 0.0
        %1073 = vmatprep.subr.mxu0 0.0
        %1074 = vmatpush1.msra.mxu0 0.0
        %1075 = vmatprep.subr.mxu0 0.0
        %1076 = vmatpush1.msra.mxu0 0.0
        %1077 = vmatprep.subr.mxu0 0.0
        %1078 = vmatpush1.msra.mxu0 0.0
        %1079 = vmatprep.subr.mxu0 0.0
        %1080 = vmatpush1.msra.mxu0 0.0
        %1081 = vmatprep.subr.mxu0 0.0
        %1082 = vmatpush1.msra.mxu0 0.0
        %1083 = vmatprep.subr.mxu0 0.0
        %1084 = vmatpush1.msra.mxu0 0.0
        %1085 = vmatprep.subr.mxu0 0.0
        %1086 = vmatpush1.msra.mxu0 0.0
        %1087 = vmatprep.subr.mxu0 0.0
        %1088 = vmatpush1.msra.mxu0 0.0
        %1089 = vmatprep.subr.mxu0 0.0
        %1090 = vmatpush1.msra.mxu0 0.0
        %1091 = vmatprep.subr.mxu0 0.0
        %1092 = vmatpush1.msra.mxu0 0.0
        %1093 = vmatprep.subr.mxu0 0.0
        %1094 = vmatpush1.msra.mxu0 0.0
        %1095 = vmatprep.subr.mxu0 0.0
        %1096 = vmatpush1.msra.mxu0 0.0
        %1097 = vmatprep.subr.mxu0 0.0
        %1098 = vmatpush1.msra.mxu0 0.0
        %1099 = vmatprep.subr.mxu0 0.0
        %1100 = vmatpush1.msra.mxu0 0.0
        %1101 = vmatprep.subr.mxu0 0.0
        %1102 = vmatpush1.msra.mxu0 0.0
        %1103 = vmatprep.subr.mxu0 0.0
        %1104 = vmatpush1.msra.mxu0 0.0
        %1105 = vmatprep.subr.mxu0 0.0
        %1106 = vmatpush1.msra.mxu0 0.0
        %1107 = vmatprep.subr.mxu0 0.0
        %1108 = vmatpush1.msra.mxu0 0.0
        %1109 = vmatprep.subr.mxu0 0.0
        %1110 = vmatpush1.msra.mxu0 0.0
        %1111 = vmatprep.subr.mxu0 0.0
        %1112 = vmatpush1.msra.mxu0 0.0
        %1113 = vmatprep.subr.mxu0 0.0
        %1114 = vmatpush1.msra.mxu0 0.0
        %1115 = vmatprep.subr.mxu0 0.0
        %1116 = vmatpush1.msra.mxu0 0.0
        %1117 = vmatprep.subr.mxu0 0.0
        %1118 = vmatpush1.msra.mxu0 0.0
        %1119 = vmatprep.subr.mxu0 0.0
        %1120 = vmatpush1.msra.mxu0 0.0
        %1121 = vmatprep.mubr.f32.mxu0 0.0
        %1122 = vmatmul.mubr.f32.gmra.mrb[0].mxu0 %v1055
        %v1123 = vpop.f32.mrb[0].mxu0
        %v1124 = vadd.f32 0.0, %v1123
        %v1125 = vpop.f32.mrb[0].mxu0
        %v1126 = vadd.f32 0.0, %v1125
        %1127 = vdwg.mxu0
        %v1128 = vadd.f32 %v1041, %v1124
        %v1129 = vadd.f32 %v1042, %v1126
        %v1130 = vld [vmem:[%s3] sm:$0xff]
        %1132 = vset.pattern.permute.xlu0 0
        %1133 = vperm.xlu0 %1132, %v1130
        %v1134 = vpop.permute.xlu0 %1133
        %v1136 = vadd.f32 %v1128, %v1134
        %v1137 = vadd.f32 %v1129, %v1134
        %v1138 = vmax.f32 %v1136, 0.0
        %v1139 = vmax.f32 %v1137, 0.0
        %1140 = vrot.lane.b32.xlu0 %v1138, 17
        %v1141 = vpop.permute.xlu0 %1140
        %1142 = vrot.lane.b32.xlu0 %v1139, 17
        %v1143 = vpop.permute.xlu0 %1142
        %v1144 = vsel %vm364, %v1141, %v1143
        %v1145 = vsel %vm364, %v1143, %v1141
        %v1146 = vmul.f32 %v1145, %v260
        %v1147 = vmul.f32 %v1144, %v264
        %v1148 = vld [vmem:[%s4] sm:$0xff]
        %1149 = vrot.lane.b32.xlu0 %v1138, 16
        %v1150 = vpop.permute.xlu0 %1149
        %1151 = vrot.lane.b32.xlu0 %v1139, 16
        %v1152 = vpop.permute.xlu0 %1151
        %v1153 = vsel %vm374, %v1150, %v1152
        %v1154 = vsel %vm374, %v1152, %v1150
        %v1155 = vmul.f32 %v1154, %v273
        %v1156 = vmul.f32 %v1153, %v277
        %s1157 = scalar_lea.vmem %s4, 8
        %v1158 = vld [vmem:[%s1157] sm:$0xff]
        %v1160 = vsel %vm381, %v1158, 0
        %1162 = vmatprep.subr.mxu0 %v1156
        %1163 = vmatpush1.msra.mxu0 %v1155
        %1164 = vmatprep.subr.mxu0 0.0
        %1165 = vmatpush1.msra.mxu0 0.0
        %1166 = vmatprep.subr.mxu0 0.0
        %1167 = vmatpush1.msra.mxu0 0.0
        %1168 = vmatprep.subr.mxu0 0.0
        %1169 = vmatpush1.msra.mxu0 0.0
        %1170 = vmatprep.subr.mxu0 0.0
        %1171 = vmatpush1.msra.mxu0 0.0
        %1172 = vmatprep.subr.mxu0 0.0
        %1173 = vmatpush1.msra.mxu0 0.0
        %1174 = vmatprep.subr.mxu0 0.0
        %1175 = vmatpush1.msra.mxu0 0.0
        %1176 = vmatprep.subr.mxu0 0.0
        %1177 = vmatpush1.msra.mxu0 0.0
        %1178 = vmatprep.subr.mxu0 0.0
        %1179 = vmatpush1.msra.mxu0 0.0
        %1180 = vmatprep.subr.mxu0 0.0
        %1181 = vmatpush1.msra.mxu0 0.0
        %1182 = vmatprep.subr.mxu0 0.0
        %1183 = vmatpush1.msra.mxu0 0.0
        %1184 = vmatprep.subr.mxu0 0.0
        %1185 = vmatpush1.msra.mxu0 0.0
        %1186 = vmatprep.subr.mxu0 0.0
        %1187 = vmatpush1.msra.mxu0 0.0
        %1188 = vmatprep.subr.mxu0 0.0
        %1189 = vmatpush1.msra.mxu0 0.0
        %1190 = vmatprep.subr.mxu0 0.0
        %1191 = vmatpush1.msra.mxu0 0.0
        %1192 = vmatprep.subr.mxu0 0.0
        %1193 = vmatpush1.msra.mxu0 0.0
        %1194 = vmatprep.subr.mxu0 0.0
        %1195 = vmatpush1.msra.mxu0 0.0
        %1196 = vmatprep.subr.mxu0 0.0
        %1197 = vmatpush1.msra.mxu0 0.0
        %1198 = vmatprep.subr.mxu0 0.0
        %1199 = vmatpush1.msra.mxu0 0.0
        %1200 = vmatprep.subr.mxu0 0.0
        %1201 = vmatpush1.msra.mxu0 0.0
        %1202 = vmatprep.subr.mxu0 0.0
        %1203 = vmatpush1.msra.mxu0 0.0
        %1204 = vmatprep.subr.mxu0 0.0
        %1205 = vmatpush1.msra.mxu0 0.0
        %1206 = vmatprep.subr.mxu0 0.0
        %1207 = vmatpush1.msra.mxu0 0.0
        %1208 = vmatprep.subr.mxu0 0.0
        %1209 = vmatpush1.msra.mxu0 0.0
        %1210 = vmatprep.subr.mxu0 0.0
        %1211 = vmatpush1.msra.mxu0 0.0
        %1212 = vmatprep.subr.mxu0 0.0
        %1213 = vmatpush1.msra.mxu0 0.0
        %1214 = vmatprep.subr.mxu0 0.0
        %1215 = vmatpush1.msra.mxu0 0.0
        %1216 = vmatprep.subr.mxu0 0.0
        %1217 = vmatpush1.msra.mxu0 0.0
        %1218 = vmatprep.subr.mxu0 0.0
        %1219 = vmatpush1.msra.mxu0 0.0
        %1220 = vmatprep.subr.mxu0 0.0
        %1221 = vmatpush1.msra.mxu0 0.0
        %1222 = vmatprep.subr.mxu0 0.0
        %1223 = vmatpush1.msra.mxu0 0.0
        %1224 = vmatprep.subr.mxu0 0.0
        %1225 = vmatpush1.msra.mxu0 0.0
        %1226 = vmatprep.mubr.f32.mxu0 0.0
        %1227 = vmatmul.mubr.f32.gmra.mrb[0].mxu0 %v1160
        %v1228 = vpop.f32.mrb[0].mxu0
        %v1229 = vadd.f32 0.0, %v1228
        %v1230 = vpop.f32.mrb[0].mxu0
        %v1231 = vadd.f32 0.0, %v1230
        %1232 = vdwg.mxu0
        %v1234 = vsel %vm381, %v1148, 0
        %1236 = vmatprep.subr.mxu0 %v1147
        %1237 = vmatpush1.msra.mxu0 %v1146
        %1238 = vmatprep.subr.mxu0 0.0
        %1239 = vmatpush1.msra.mxu0 0.0
        %1240 = vmatprep.subr.mxu0 0.0
        %1241 = vmatpush1.msra.mxu0 0.0
        %1242 = vmatprep.subr.mxu0 0.0
        %1243 = vmatpush1.msra.mxu0 0.0
        %1244 = vmatprep.subr.mxu0 0.0
        %1245 = vmatpush1.msra.mxu0 0.0
        %1246 = vmatprep.subr.mxu0 0.0
        %1247 = vmatpush1.msra.mxu0 0.0
        %1248 = vmatprep.subr.mxu0 0.0
        %1249 = vmatpush1.msra.mxu0 0.0
        %1250 = vmatprep.subr.mxu0 0.0
        %1251 = vmatpush1.msra.mxu0 0.0
        %1252 = vmatprep.subr.mxu0 0.0
        %1253 = vmatpush1.msra.mxu0 0.0
        %1254 = vmatprep.subr.mxu0 0.0
        %1255 = vmatpush1.msra.mxu0 0.0
        %1256 = vmatprep.subr.mxu0 0.0
        %1257 = vmatpush1.msra.mxu0 0.0
        %1258 = vmatprep.subr.mxu0 0.0
        %1259 = vmatpush1.msra.mxu0 0.0
        %1260 = vmatprep.subr.mxu0 0.0
        %1261 = vmatpush1.msra.mxu0 0.0
        %1262 = vmatprep.subr.mxu0 0.0
        %1263 = vmatpush1.msra.mxu0 0.0
        %1264 = vmatprep.subr.mxu0 0.0
        %1265 = vmatpush1.msra.mxu0 0.0
        %1266 = vmatprep.subr.mxu0 0.0
        %1267 = vmatpush1.msra.mxu0 0.0
        %1268 = vmatprep.subr.mxu0 0.0
        %1269 = vmatpush1.msra.mxu0 0.0
        %1270 = vmatprep.subr.mxu0 0.0
        %1271 = vmatpush1.msra.mxu0 0.0
        %1272 = vmatprep.subr.mxu0 0.0
        %1273 = vmatpush1.msra.mxu0 0.0
        %1274 = vmatprep.subr.mxu0 0.0
        %1275 = vmatpush1.msra.mxu0 0.0
        %1276 = vmatprep.subr.mxu0 0.0
        %1277 = vmatpush1.msra.mxu0 0.0
        %1278 = vmatprep.subr.mxu0 0.0
        %1279 = vmatpush1.msra.mxu0 0.0
        %1280 = vmatprep.subr.mxu0 0.0
        %1281 = vmatpush1.msra.mxu0 0.0
        %1282 = vmatprep.subr.mxu0 0.0
        %1283 = vmatpush1.msra.mxu0 0.0
        %1284 = vmatprep.subr.mxu0 0.0
        %1285 = vmatpush1.msra.mxu0 0.0
        %1286 = vmatprep.subr.mxu0 0.0
        %1287 = vmatpush1.msra.mxu0 0.0
        %1288 = vmatprep.subr.mxu0 0.0
        %1289 = vmatpush1.msra.mxu0 0.0
        %1290 = vmatprep.subr.mxu0 0.0
        %1291 = vmatpush1.msra.mxu0 0.0
        %1292 = vmatprep.subr.mxu0 0.0
        %1293 = vmatpush1.msra.mxu0 0.0
        %1294 = vmatprep.subr.mxu0 0.0
        %1295 = vmatpush1.msra.mxu0 0.0
        %1296 = vmatprep.subr.mxu0 0.0
        %1297 = vmatpush1.msra.mxu0 0.0
        %1298 = vmatprep.subr.mxu0 0.0
        %1299 = vmatpush1.msra.mxu0 0.0
        %1300 = vmatprep.mubr.f32.mxu0 0.0
        %1301 = vmatmul.mubr.f32.gmra.mrb[0].mxu0 %v1234
        %v1302 = vpop.f32.mrb[0].mxu0
        %v1303 = vadd.f32 %v1229, %v1302
        %v1304 = vpop.f32.mrb[0].mxu0
        %v1305 = vadd.f32 %v1231, %v1304
        %1306 = vdwg.mxu0
        %1307 = vrot.lane.b32.xlu0 %v1138, 15
        %v1308 = vpop.permute.xlu0 %1307
        %1309 = vrot.lane.b32.xlu0 %v1139, 15
        %v1310 = vpop.permute.xlu0 %1309
        %v1311 = vsel %vm534, %v1308, %v1310
        %v1312 = vsel %vm534, %v1310, %v1308
        %v1313 = vmul.f32 %v1312, %v286
        %v1314 = vmul.f32 %v1311, %v290
        %s1315 = scalar_lea.vmem %s4, 16
        %v1316 = vld [vmem:[%s1315] sm:$0xff]
        %v1318 = vsel %vm381, %v1316, 0
        %1320 = vmatprep.subr.mxu0 %v1314
        %1321 = vmatpush1.msra.mxu0 %v1313
        %1322 = vmatprep.subr.mxu0 0.0
        %1323 = vmatpush1.msra.mxu0 0.0
        %1324 = vmatprep.subr.mxu0 0.0
        %1325 = vmatpush1.msra.mxu0 0.0
        %1326 = vmatprep.subr.mxu0 0.0
        %1327 = vmatpush1.msra.mxu0 0.0
        %1328 = vmatprep.subr.mxu0 0.0
        %1329 = vmatpush1.msra.mxu0 0.0
        %1330 = vmatprep.subr.mxu0 0.0
        %1331 = vmatpush1.msra.mxu0 0.0
        %1332 = vmatprep.subr.mxu0 0.0
        %1333 = vmatpush1.msra.mxu0 0.0
        %1334 = vmatprep.subr.mxu0 0.0
        %1335 = vmatpush1.msra.mxu0 0.0
        %1336 = vmatprep.subr.mxu0 0.0
        %1337 = vmatpush1.msra.mxu0 0.0
        %1338 = vmatprep.subr.mxu0 0.0
        %1339 = vmatpush1.msra.mxu0 0.0
        %1340 = vmatprep.subr.mxu0 0.0
        %1341 = vmatpush1.msra.mxu0 0.0
        %1342 = vmatprep.subr.mxu0 0.0
        %1343 = vmatpush1.msra.mxu0 0.0
        %1344 = vmatprep.subr.mxu0 0.0
        %1345 = vmatpush1.msra.mxu0 0.0
        %1346 = vmatprep.subr.mxu0 0.0
        %1347 = vmatpush1.msra.mxu0 0.0
        %1348 = vmatprep.subr.mxu0 0.0
        %1349 = vmatpush1.msra.mxu0 0.0
        %1350 = vmatprep.subr.mxu0 0.0
        %1351 = vmatpush1.msra.mxu0 0.0
        %1352 = vmatprep.subr.mxu0 0.0
        %1353 = vmatpush1.msra.mxu0 0.0
        %1354 = vmatprep.subr.mxu0 0.0
        %1355 = vmatpush1.msra.mxu0 0.0
        %1356 = vmatprep.subr.mxu0 0.0
        %1357 = vmatpush1.msra.mxu0 0.0
        %1358 = vmatprep.subr.mxu0 0.0
        %1359 = vmatpush1.msra.mxu0 0.0
        %1360 = vmatprep.subr.mxu0 0.0
        %1361 = vmatpush1.msra.mxu0 0.0
        %1362 = vmatprep.subr.mxu0 0.0
        %1363 = vmatpush1.msra.mxu0 0.0
        %1364 = vmatprep.subr.mxu0 0.0
        %1365 = vmatpush1.msra.mxu0 0.0
        %1366 = vmatprep.subr.mxu0 0.0
        %1367 = vmatpush1.msra.mxu0 0.0
        %1368 = vmatprep.subr.mxu0 0.0
        %1369 = vmatpush1.msra.mxu0 0.0
        %1370 = vmatprep.subr.mxu0 0.0
        %1371 = vmatpush1.msra.mxu0 0.0
        %1372 = vmatprep.subr.mxu0 0.0
        %1373 = vmatpush1.msra.mxu0 0.0
        %1374 = vmatprep.subr.mxu0 0.0
        %1375 = vmatpush1.msra.mxu0 0.0
        %1376 = vmatprep.subr.mxu0 0.0
        %1377 = vmatpush1.msra.mxu0 0.0
        %1378 = vmatprep.subr.mxu0 0.0
        %1379 = vmatpush1.msra.mxu0 0.0
        %1380 = vmatprep.subr.mxu0 0.0
        %1381 = vmatpush1.msra.mxu0 0.0
        %1382 = vmatprep.subr.mxu0 0.0
        %1383 = vmatpush1.msra.mxu0 0.0
        %1384 = vmatprep.mubr.f32.mxu0 0.0
        %1385 = vmatmul.mubr.f32.gmra.mrb[0].mxu0 %v1318
        %v1386 = vpop.f32.mrb[0].mxu0
        %v1387 = vadd.f32 0.0, %v1386
        %v1388 = vpop.f32.mrb[0].mxu0
        %v1389 = vadd.f32 0.0, %v1388
        %1390 = vdwg.mxu0
        %v1391 = vadd.f32 %v1303, %v1387
        %v1392 = vadd.f32 %v1305, %v1389
        %1393 = vrot.lane.b32.xlu0 %v1138, 1
        %v1394 = vpop.permute.xlu0 %1393
        %1395 = vrot.lane.b32.xlu0 %v1139, 1
        %v1396 = vpop.permute.xlu0 %1395
        %v1397 = vsel %vm621, %v1394, %v1396
        %v1398 = vsel %vm621, %v1396, %v1394
        %v1399 = vmul.f32 %v1398, %v299
        %v1400 = vmul.f32 %v1397, %v303
        %s1401 = scalar_lea.vmem %s4, 24
        %v1402 = vld [vmem:[%s1401] sm:$0xff]
        %v1404 = vsel %vm381, %v1402, 0
        %1406 = vmatprep.subr.mxu0 %v1400
        %1407 = vmatpush1.msra.mxu0 %v1399
        %1408 = vmatprep.subr.mxu0 0.0
        %1409 = vmatpush1.msra.mxu0 0.0
        %1410 = vmatprep.subr.mxu0 0.0
        %1411 = vmatpush1.msra.mxu0 0.0
        %1412 = vmatprep.subr.mxu0 0.0
        %1413 = vmatpush1.msra.mxu0 0.0
        %1414 = vmatprep.subr.mxu0 0.0
        %1415 = vmatpush1.msra.mxu0 0.0
        %1416 = vmatprep.subr.mxu0 0.0
        %1417 = vmatpush1.msra.mxu0 0.0
        %1418 = vmatprep.subr.mxu0 0.0
        %1419 = vmatpush1.msra.mxu0 0.0
        %1420 = vmatprep.subr.mxu0 0.0
        %1421 = vmatpush1.msra.mxu0 0.0
        %1422 = vmatprep.subr.mxu0 0.0
        %1423 = vmatpush1.msra.mxu0 0.0
        %1424 = vmatprep.subr.mxu0 0.0
        %1425 = vmatpush1.msra.mxu0 0.0
        %1426 = vmatprep.subr.mxu0 0.0
        %1427 = vmatpush1.msra.mxu0 0.0
        %1428 = vmatprep.subr.mxu0 0.0
        %1429 = vmatpush1.msra.mxu0 0.0
        %1430 = vmatprep.subr.mxu0 0.0
        %1431 = vmatpush1.msra.mxu0 0.0
        %1432 = vmatprep.subr.mxu0 0.0
        %1433 = vmatpush1.msra.mxu0 0.0
        %1434 = vmatprep.subr.mxu0 0.0
        %1435 = vmatpush1.msra.mxu0 0.0
        %1436 = vmatprep.subr.mxu0 0.0
        %1437 = vmatpush1.msra.mxu0 0.0
        %1438 = vmatprep.subr.mxu0 0.0
        %1439 = vmatpush1.msra.mxu0 0.0
        %1440 = vmatprep.subr.mxu0 0.0
        %1441 = vmatpush1.msra.mxu0 0.0
        %1442 = vmatprep.subr.mxu0 0.0
        %1443 = vmatpush1.msra.mxu0 0.0
        %1444 = vmatprep.subr.mxu0 0.0
        %1445 = vmatpush1.msra.mxu0 0.0
        %1446 = vmatprep.subr.mxu0 0.0
        %1447 = vmatpush1.msra.mxu0 0.0
        %1448 = vmatprep.subr.mxu0 0.0
        %1449 = vmatpush1.msra.mxu0 0.0
        %1450 = vmatprep.subr.mxu0 0.0
        %1451 = vmatpush1.msra.mxu0 0.0
        %1452 = vmatprep.subr.mxu0 0.0
        %1453 = vmatpush1.msra.mxu0 0.0
        %1454 = vmatprep.subr.mxu0 0.0
        %1455 = vmatpush1.msra.mxu0 0.0
        %1456 = vmatprep.subr.mxu0 0.0
        %1457 = vmatpush1.msra.mxu0 0.0
        %1458 = vmatprep.subr.mxu0 0.0
        %1459 = vmatpush1.msra.mxu0 0.0
        %1460 = vmatprep.subr.mxu0 0.0
        %1461 = vmatpush1.msra.mxu0 0.0
        %1462 = vmatprep.subr.mxu0 0.0
        %1463 = vmatpush1.msra.mxu0 0.0
        %1464 = vmatprep.subr.mxu0 0.0
        %1465 = vmatpush1.msra.mxu0 0.0
        %1466 = vmatprep.subr.mxu0 0.0
        %1467 = vmatpush1.msra.mxu0 0.0
        %1468 = vmatprep.subr.mxu0 0.0
        %1469 = vmatpush1.msra.mxu0 0.0
        %1470 = vmatprep.mubr.f32.mxu0 0.0
        %1471 = vmatmul.mubr.f32.gmra.mrb[0].mxu0 %v1404
        %v1472 = vpop.f32.mrb[0].mxu0
        %v1473 = vadd.f32 0.0, %v1472
        %v1474 = vpop.f32.mrb[0].mxu0
        %v1475 = vadd.f32 0.0, %v1474
        %1476 = vdwg.mxu0
        %v1477 = vadd.f32 %v1391, %v1473
        %v1478 = vadd.f32 %v1392, %v1475
        %s1479 = scalar_lea.vmem %s4, 32
        %v1480 = vld [vmem:[%s1479] sm:$0xff]
        %v1482 = vsel %vm381, %v1480, 0
        %1484 = vmatprep.subr.mxu0 %v1139
        %1485 = vmatpush1.msra.mxu0 %v1138
        %1486 = vmatprep.subr.mxu0 0.0
        %1487 = vmatpush1.msra.mxu0 0.0
        %1488 = vmatprep.subr.mxu0 0.0
        %1489 = vmatpush1.msra.mxu0 0.0
        %1490 = vmatprep.subr.mxu0 0.0
        %1491 = vmatpush1.msra.mxu0 0.0
        %1492 = vmatprep.subr.mxu0 0.0
        %1493 = vmatpush1.msra.mxu0 0.0
        %1494 = vmatprep.subr.mxu0 0.0
        %1495 = vmatpush1.msra.mxu0 0.0
        %1496 = vmatprep.subr.mxu0 0.0
        %1497 = vmatpush1.msra.mxu0 0.0
        %1498 = vmatprep.subr.mxu0 0.0
        %1499 = vmatpush1.msra.mxu0 0.0
        %1500 = vmatprep.subr.mxu0 0.0
        %1501 = vmatpush1.msra.mxu0 0.0
        %1502 = vmatprep.subr.mxu0 0.0
        %1503 = vmatpush1.msra.mxu0 0.0
        %1504 = vmatprep.subr.mxu0 0.0
        %1505 = vmatpush1.msra.mxu0 0.0
        %1506 = vmatprep.subr.mxu0 0.0
        %1507 = vmatpush1.msra.mxu0 0.0
        %1508 = vmatprep.subr.mxu0 0.0
        %1509 = vmatpush1.msra.mxu0 0.0
        %1510 = vmatprep.subr.mxu0 0.0
        %1511 = vmatpush1.msra.mxu0 0.0
        %1512 = vmatprep.subr.mxu0 0.0
        %1513 = vmatpush1.msra.mxu0 0.0
        %1514 = vmatprep.subr.mxu0 0.0
        %1515 = vmatpush1.msra.mxu0 0.0
        %1516 = vmatprep.subr.mxu0 0.0
        %1517 = vmatpush1.msra.mxu0 0.0
        %1518 = vmatprep.subr.mxu0 0.0
        %1519 = vmatpush1.msra.mxu0 0.0
        %1520 = vmatprep.subr.mxu0 0.0
        %1521 = vmatpush1.msra.mxu0 0.0
        %1522 = vmatprep.subr.mxu0 0.0
        %1523 = vmatpush1.msra.mxu0 0.0
        %1524 = vmatprep.subr.mxu0 0.0
        %1525 = vmatpush1.msra.mxu0 0.0
        %1526 = vmatprep.subr.mxu0 0.0
        %1527 = vmatpush1.msra.mxu0 0.0
        %1528 = vmatprep.subr.mxu0 0.0
        %1529 = vmatpush1.msra.mxu0 0.0
        %1530 = vmatprep.subr.mxu0 0.0
        %1531 = vmatpush1.msra.mxu0 0.0
        %1532 = vmatprep.subr.mxu0 0.0
        %1533 = vmatpush1.msra.mxu0 0.0
        %1534 = vmatprep.subr.mxu0 0.0
        %1535 = vmatpush1.msra.mxu0 0.0
        %1536 = vmatprep.subr.mxu0 0.0
        %1537 = vmatpush1.msra.mxu0 0.0
        %1538 = vmatprep.subr.mxu0 0.0
        %1539 = vmatpush1.msra.mxu0 0.0
        %1540 = vmatprep.subr.mxu0 0.0
        %1541 = vmatpush1.msra.mxu0 0.0
        %1542 = vmatprep.subr.mxu0 0.0
        %1543 = vmatpush1.msra.mxu0 0.0
        %1544 = vmatprep.subr.mxu0 0.0
        %1545 = vmatpush1.msra.mxu0 0.0
        %1546 = vmatprep.subr.mxu0 0.0
        %1547 = vmatpush1.msra.mxu0 0.0
        %1548 = vmatprep.mubr.f32.mxu0 0.0
        %1549 = vmatmul.mubr.f32.gmra.mrb[0].mxu0 %v1482
        %v1550 = vpop.f32.mrb[0].mxu0
        %v1551 = vadd.f32 0.0, %v1550
        %v1552 = vpop.f32.mrb[0].mxu0
        %v1553 = vadd.f32 0.0, %v1552
        %1554 = vdwg.mxu0
        %v1555 = vadd.f32 %v1477, %v1551
        %v1556 = vadd.f32 %v1478, %v1553
        %1557 = vrot.lane.b32.xlu0 %v1138, 127
        %v1558 = vpop.permute.xlu0 %1557
        %1559 = vrot.lane.b32.xlu0 %v1139, 127
        %v1560 = vpop.permute.xlu0 %1559
        %v1561 = vsel %vm786, %v1558, %v1560
        %v1562 = vsel %vm786, %v1560, %v1558
        %v1563 = vmul.f32 %v1561, %v312
        %v1564 = vmul.f32 %v1562, %v316
        %s1565 = scalar_lea.vmem %s4, 40
        %v1566 = vld [vmem:[%s1565] sm:$0xff]
        %v1568 = vsel %vm381, %v1566, 0
        %1570 = vmatprep.subr.mxu0 %v1564
        %1571 = vmatpush1.msra.mxu0 %v1563
        %1572 = vmatprep.subr.mxu0 0.0
        %1573 = vmatpush1.msra.mxu0 0.0
        %1574 = vmatprep.subr.mxu0 0.0
        %1575 = vmatpush1.msra.mxu0 0.0
        %1576 = vmatprep.subr.mxu0 0.0
        %1577 = vmatpush1.msra.mxu0 0.0
        %1578 = vmatprep.subr.mxu0 0.0
        %1579 = vmatpush1.msra.mxu0 0.0
        %1580 = vmatprep.subr.mxu0 0.0
        %1581 = vmatpush1.msra.mxu0 0.0
        %1582 = vmatprep.subr.mxu0 0.0
        %1583 = vmatpush1.msra.mxu0 0.0
        %1584 = vmatprep.subr.mxu0 0.0
        %1585 = vmatpush1.msra.mxu0 0.0
        %1586 = vmatprep.subr.mxu0 0.0
        %1587 = vmatpush1.msra.mxu0 0.0
        %1588 = vmatprep.subr.mxu0 0.0
        %1589 = vmatpush1.msra.mxu0 0.0
        %1590 = vmatprep.subr.mxu0 0.0
        %1591 = vmatpush1.msra.mxu0 0.0
        %1592 = vmatprep.subr.mxu0 0.0
        %1593 = vmatpush1.msra.mxu0 0.0
        %1594 = vmatprep.subr.mxu0 0.0
        %1595 = vmatpush1.msra.mxu0 0.0
        %1596 = vmatprep.subr.mxu0 0.0
        %1597 = vmatpush1.msra.mxu0 0.0
        %1598 = vmatprep.subr.mxu0 0.0
        %1599 = vmatpush1.msra.mxu0 0.0
        %1600 = vmatprep.subr.mxu0 0.0
        %1601 = vmatpush1.msra.mxu0 0.0
        %1602 = vmatprep.subr.mxu0 0.0
        %1603 = vmatpush1.msra.mxu0 0.0
        %1604 = vmatprep.subr.mxu0 0.0
        %1605 = vmatpush1.msra.mxu0 0.0
        %1606 = vmatprep.subr.mxu0 0.0
        %1607 = vmatpush1.msra.mxu0 0.0
        %1608 = vmatprep.subr.mxu0 0.0
        %1609 = vmatpush1.msra.mxu0 0.0
        %1610 = vmatprep.subr.mxu0 0.0
        %1611 = vmatpush1.msra.mxu0 0.0
        %1612 = vmatprep.subr.mxu0 0.0
        %1613 = vmatpush1.msra.mxu0 0.0
        %1614 = vmatprep.subr.mxu0 0.0
        %1615 = vmatpush1.msra.mxu0 0.0
        %1616 = vmatprep.subr.mxu0 0.0
        %1617 = vmatpush1.msra.mxu0 0.0
        %1618 = vmatprep.subr.mxu0 0.0
        %1619 = vmatpush1.msra.mxu0 0.0
        %1620 = vmatprep.subr.mxu0 0.0
        %1621 = vmatpush1.msra.mxu0 0.0
        %1622 = vmatprep.subr.mxu0 0.0
        %1623 = vmatpush1.msra.mxu0 0.0
        %1624 = vmatprep.subr.mxu0 0.0
        %1625 = vmatpush1.msra.mxu0 0.0
        %1626 = vmatprep.subr.mxu0 0.0
        %1627 = vmatpush1.msra.mxu0 0.0
        %1628 = vmatprep.subr.mxu0 0.0
        %1629 = vmatpush1.msra.mxu0 0.0
        %1630 = vmatprep.subr.mxu0 0.0
        %1631 = vmatpush1.msra.mxu0 0.0
        %1632 = vmatprep.subr.mxu0 0.0
        %1633 = vmatpush1.msra.mxu0 0.0
        %1634 = vmatprep.mubr.f32.mxu0 0.0
        %1635 = vmatmul.mubr.f32.gmra.mrb[0].mxu0 %v1568
        %v1636 = vpop.f32.mrb[0].mxu0
        %v1637 = vadd.f32 0.0, %v1636
        %v1638 = vpop.f32.mrb[0].mxu0
        %v1639 = vadd.f32 0.0, %v1638
        %1640 = vdwg.mxu0
        %v1641 = vadd.f32 %v1555, %v1637
        %v1642 = vadd.f32 %v1556, %v1639
        %1643 = vrot.lane.b32.xlu0 %v1138, 113
        %v1644 = vpop.permute.xlu0 %1643
        %1645 = vrot.lane.b32.xlu0 %v1139, 113
        %v1646 = vpop.permute.xlu0 %1645
        %v1647 = vsel %vm873, %v1644, %v1646
        %v1648 = vsel %vm873, %v1646, %v1644
        %v1649 = vmul.f32 %v1647, %v325
        %v1650 = vmul.f32 %v1648, %v329
        %s1651 = scalar_lea.vmem %s4, 48
        %v1652 = vld [vmem:[%s1651] sm:$0xff]
        %v1654 = vsel %vm381, %v1652, 0
        %1656 = vmatprep.subr.mxu0 %v1650
        %1657 = vmatpush1.msra.mxu0 %v1649
        %1658 = vmatprep.subr.mxu0 0.0
        %1659 = vmatpush1.msra.mxu0 0.0
        %1660 = vmatprep.subr.mxu0 0.0
        %1661 = vmatpush1.msra.mxu0 0.0
        %1662 = vmatprep.subr.mxu0 0.0
        %1663 = vmatpush1.msra.mxu0 0.0
        %1664 = vmatprep.subr.mxu0 0.0
        %1665 = vmatpush1.msra.mxu0 0.0
        %1666 = vmatprep.subr.mxu0 0.0
        %1667 = vmatpush1.msra.mxu0 0.0
        %1668 = vmatprep.subr.mxu0 0.0
        %1669 = vmatpush1.msra.mxu0 0.0
        %1670 = vmatprep.subr.mxu0 0.0
        %1671 = vmatpush1.msra.mxu0 0.0
        %1672 = vmatprep.subr.mxu0 0.0
        %1673 = vmatpush1.msra.mxu0 0.0
        %1674 = vmatprep.subr.mxu0 0.0
        %1675 = vmatpush1.msra.mxu0 0.0
        %1676 = vmatprep.subr.mxu0 0.0
        %1677 = vmatpush1.msra.mxu0 0.0
        %1678 = vmatprep.subr.mxu0 0.0
        %1679 = vmatpush1.msra.mxu0 0.0
        %1680 = vmatprep.subr.mxu0 0.0
        %1681 = vmatpush1.msra.mxu0 0.0
        %1682 = vmatprep.subr.mxu0 0.0
        %1683 = vmatpush1.msra.mxu0 0.0
        %1684 = vmatprep.subr.mxu0 0.0
        %1685 = vmatpush1.msra.mxu0 0.0
        %1686 = vmatprep.subr.mxu0 0.0
        %1687 = vmatpush1.msra.mxu0 0.0
        %1688 = vmatprep.subr.mxu0 0.0
        %1689 = vmatpush1.msra.mxu0 0.0
        %1690 = vmatprep.subr.mxu0 0.0
        %1691 = vmatpush1.msra.mxu0 0.0
        %1692 = vmatprep.subr.mxu0 0.0
        %1693 = vmatpush1.msra.mxu0 0.0
        %1694 = vmatprep.subr.mxu0 0.0
        %1695 = vmatpush1.msra.mxu0 0.0
        %1696 = vmatprep.subr.mxu0 0.0
        %1697 = vmatpush1.msra.mxu0 0.0
        %1698 = vmatprep.subr.mxu0 0.0
        %1699 = vmatpush1.msra.mxu0 0.0
        %1700 = vmatprep.subr.mxu0 0.0
        %1701 = vmatpush1.msra.mxu0 0.0
        %1702 = vmatprep.subr.mxu0 0.0
        %1703 = vmatpush1.msra.mxu0 0.0
        %1704 = vmatprep.subr.mxu0 0.0
        %1705 = vmatpush1.msra.mxu0 0.0
        %1706 = vmatprep.subr.mxu0 0.0
        %1707 = vmatpush1.msra.mxu0 0.0
        %1708 = vmatprep.subr.mxu0 0.0
        %1709 = vmatpush1.msra.mxu0 0.0
        %1710 = vmatprep.subr.mxu0 0.0
        %1711 = vmatpush1.msra.mxu0 0.0
        %1712 = vmatprep.subr.mxu0 0.0
        %1713 = vmatpush1.msra.mxu0 0.0
        %1714 = vmatprep.subr.mxu0 0.0
        %1715 = vmatpush1.msra.mxu0 0.0
        %1716 = vmatprep.subr.mxu0 0.0
        %1717 = vmatpush1.msra.mxu0 0.0
        %1718 = vmatprep.subr.mxu0 0.0
        %1719 = vmatpush1.msra.mxu0 0.0
        %1720 = vmatprep.mubr.f32.mxu0 0.0
        %1721 = vmatmul.mubr.f32.gmra.mrb[0].mxu0 %v1654
        %v1722 = vpop.f32.mrb[0].mxu0
        %v1723 = vadd.f32 0.0, %v1722
        %v1724 = vpop.f32.mrb[0].mxu0
        %v1725 = vadd.f32 0.0, %v1724
        %1726 = vdwg.mxu0
        %v1727 = vadd.f32 %v1641, %v1723
        %v1728 = vadd.f32 %v1642, %v1725
        %1729 = vrot.lane.b32.xlu0 %v1138, 112
        %v1730 = vpop.permute.xlu0 %1729
        %1731 = vrot.lane.b32.xlu0 %v1139, 112
        %v1732 = vpop.permute.xlu0 %1731
        %v1733 = vsel %vm960, %v1730, %v1732
        %v1734 = vsel %vm960, %v1732, %v1730
        %v1735 = vmul.f32 %v1733, %v338
        %v1736 = vmul.f32 %v1734, %v342
        %s1737 = scalar_lea.vmem %s4, 56
        %v1738 = vld [vmem:[%s1737] sm:$0xff]
        %v1740 = vsel %vm381, %v1738, 0
        %1742 = vmatprep.subr.mxu0 %v1736
        %1743 = vmatpush1.msra.mxu0 %v1735
        %1744 = vmatprep.subr.mxu0 0.0
        %1745 = vmatpush1.msra.mxu0 0.0
        %1746 = vmatprep.subr.mxu0 0.0
        %1747 = vmatpush1.msra.mxu0 0.0
        %1748 = vmatprep.subr.mxu0 0.0
        %1749 = vmatpush1.msra.mxu0 0.0
        %1750 = vmatprep.subr.mxu0 0.0
        %1751 = vmatpush1.msra.mxu0 0.0
        %1752 = vmatprep.subr.mxu0 0.0
        %1753 = vmatpush1.msra.mxu0 0.0
        %1754 = vmatprep.subr.mxu0 0.0
        %1755 = vmatpush1.msra.mxu0 0.0
        %1756 = vmatprep.subr.mxu0 0.0
        %1757 = vmatpush1.msra.mxu0 0.0
        %1758 = vmatprep.subr.mxu0 0.0
        %1759 = vmatpush1.msra.mxu0 0.0
        %1760 = vmatprep.subr.mxu0 0.0
        %1761 = vmatpush1.msra.mxu0 0.0
        %1762 = vmatprep.subr.mxu0 0.0
        %1763 = vmatpush1.msra.mxu0 0.0
        %1764 = vmatprep.subr.mxu0 0.0
        %1765 = vmatpush1.msra.mxu0 0.0
        %1766 = vmatprep.subr.mxu0 0.0
        %1767 = vmatpush1.msra.mxu0 0.0
        %1768 = vmatprep.subr.mxu0 0.0
        %1769 = vmatpush1.msra.mxu0 0.0
        %1770 = vmatprep.subr.mxu0 0.0
        %1771 = vmatpush1.msra.mxu0 0.0
        %1772 = vmatprep.subr.mxu0 0.0
        %1773 = vmatpush1.msra.mxu0 0.0
        %1774 = vmatprep.subr.mxu0 0.0
        %1775 = vmatpush1.msra.mxu0 0.0
        %1776 = vmatprep.subr.mxu0 0.0
        %1777 = vmatpush1.msra.mxu0 0.0
        %1778 = vmatprep.subr.mxu0 0.0
        %1779 = vmatpush1.msra.mxu0 0.0
        %1780 = vmatprep.subr.mxu0 0.0
        %1781 = vmatpush1.msra.mxu0 0.0
        %1782 = vmatprep.subr.mxu0 0.0
        %1783 = vmatpush1.msra.mxu0 0.0
        %1784 = vmatprep.subr.mxu0 0.0
        %1785 = vmatpush1.msra.mxu0 0.0
        %1786 = vmatprep.subr.mxu0 0.0
        %1787 = vmatpush1.msra.mxu0 0.0
        %1788 = vmatprep.subr.mxu0 0.0
        %1789 = vmatpush1.msra.mxu0 0.0
        %1790 = vmatprep.subr.mxu0 0.0
        %1791 = vmatpush1.msra.mxu0 0.0
        %1792 = vmatprep.subr.mxu0 0.0
        %1793 = vmatpush1.msra.mxu0 0.0
        %1794 = vmatprep.subr.mxu0 0.0
        %1795 = vmatpush1.msra.mxu0 0.0
        %1796 = vmatprep.subr.mxu0 0.0
        %1797 = vmatpush1.msra.mxu0 0.0
        %1798 = vmatprep.subr.mxu0 0.0
        %1799 = vmatpush1.msra.mxu0 0.0
        %1800 = vmatprep.subr.mxu0 0.0
        %1801 = vmatpush1.msra.mxu0 0.0
        %1802 = vmatprep.subr.mxu0 0.0
        %1803 = vmatpush1.msra.mxu0 0.0
        %1804 = vmatprep.subr.mxu0 0.0
        %1805 = vmatpush1.msra.mxu0 0.0
        %1806 = vmatprep.mubr.f32.mxu0 0.0
        %1807 = vmatmul.mubr.f32.gmra.mrb[0].mxu0 %v1740
        %v1808 = vpop.f32.mrb[0].mxu0
        %v1809 = vadd.f32 0.0, %v1808
        %v1810 = vpop.f32.mrb[0].mxu0
        %v1811 = vadd.f32 0.0, %v1810
        %1812 = vdwg.mxu0
        %v1813 = vadd.f32 %v1727, %v1809
        %v1814 = vadd.f32 %v1728, %v1811
        %1815 = vrot.lane.b32.xlu0 %v1138, 111
        %v1816 = vpop.permute.xlu0 %1815
        %1817 = vrot.lane.b32.xlu0 %v1139, 111
        %v1818 = vpop.permute.xlu0 %1817
        %v1819 = vsel %vm1047, %v1816, %v1818
        %v1820 = vsel %vm1047, %v1818, %v1816
        %v1821 = vmul.f32 %v1819, %v351
        %v1822 = vmul.f32 %v1820, %v355
        %s1823 = scalar_lea.vmem %s4, 64
        %v1824 = vld [vmem:[%s1823] sm:$0xff]
        %v1826 = vsel %vm381, %v1824, 0
        %1828 = vmatprep.subr.mxu0 %v1822
        %1829 = vmatpush1.msra.mxu0 %v1821
        %1830 = vmatprep.subr.mxu0 0.0
        %1831 = vmatpush1.msra.mxu0 0.0
        %1832 = vmatprep.subr.mxu0 0.0
        %1833 = vmatpush1.msra.mxu0 0.0
        %1834 = vmatprep.subr.mxu0 0.0
        %1835 = vmatpush1.msra.mxu0 0.0
        %1836 = vmatprep.subr.mxu0 0.0
        %1837 = vmatpush1.msra.mxu0 0.0
        %1838 = vmatprep.subr.mxu0 0.0
        %1839 = vmatpush1.msra.mxu0 0.0
        %1840 = vmatprep.subr.mxu0 0.0
        %1841 = vmatpush1.msra.mxu0 0.0
        %1842 = vmatprep.subr.mxu0 0.0
        %1843 = vmatpush1.msra.mxu0 0.0
        %1844 = vmatprep.subr.mxu0 0.0
        %1845 = vmatpush1.msra.mxu0 0.0
        %1846 = vmatprep.subr.mxu0 0.0
        %1847 = vmatpush1.msra.mxu0 0.0
        %1848 = vmatprep.subr.mxu0 0.0
        %1849 = vmatpush1.msra.mxu0 0.0
        %1850 = vmatprep.subr.mxu0 0.0
        %1851 = vmatpush1.msra.mxu0 0.0
        %1852 = vmatprep.subr.mxu0 0.0
        %1853 = vmatpush1.msra.mxu0 0.0
        %1854 = vmatprep.subr.mxu0 0.0
        %1855 = vmatpush1.msra.mxu0 0.0
        %1856 = vmatprep.subr.mxu0 0.0
        %1857 = vmatpush1.msra.mxu0 0.0
        %1858 = vmatprep.subr.mxu0 0.0
        %1859 = vmatpush1.msra.mxu0 0.0
        %1860 = vmatprep.subr.mxu0 0.0
        %1861 = vmatpush1.msra.mxu0 0.0
        %1862 = vmatprep.subr.mxu0 0.0
        %1863 = vmatpush1.msra.mxu0 0.0
        %1864 = vmatprep.subr.mxu0 0.0
        %1865 = vmatpush1.msra.mxu0 0.0
        %1866 = vmatprep.subr.mxu0 0.0
        %1867 = vmatpush1.msra.mxu0 0.0
        %1868 = vmatprep.subr.mxu0 0.0
        %1869 = vmatpush1.msra.mxu0 0.0
        %1870 = vmatprep.subr.mxu0 0.0
        %1871 = vmatpush1.msra.mxu0 0.0
        %1872 = vmatprep.subr.mxu0 0.0
        %1873 = vmatpush1.msra.mxu0 0.0
        %1874 = vmatprep.subr.mxu0 0.0
        %1875 = vmatpush1.msra.mxu0 0.0
        %1876 = vmatprep.subr.mxu0 0.0
        %1877 = vmatpush1.msra.mxu0 0.0
        %1878 = vmatprep.subr.mxu0 0.0
        %1879 = vmatpush1.msra.mxu0 0.0
        %1880 = vmatprep.subr.mxu0 0.0
        %1881 = vmatpush1.msra.mxu0 0.0
        %1882 = vmatprep.subr.mxu0 0.0
        %1883 = vmatpush1.msra.mxu0 0.0
        %1884 = vmatprep.subr.mxu0 0.0
        %1885 = vmatpush1.msra.mxu0 0.0
        %1886 = vmatprep.subr.mxu0 0.0
        %1887 = vmatpush1.msra.mxu0 0.0
        %1888 = vmatprep.subr.mxu0 0.0
        %1889 = vmatpush1.msra.mxu0 0.0
        %1890 = vmatprep.subr.mxu0 0.0
        %1891 = vmatpush1.msra.mxu0 0.0
        %1892 = vmatprep.mubr.f32.mxu0 0.0
        %1893 = vmatmul.mubr.f32.gmra.mrb[0].mxu0 %v1826
        %v1894 = vpop.f32.mrb[0].mxu0
        %v1895 = vadd.f32 0.0, %v1894
        %v1896 = vpop.f32.mrb[0].mxu0
        %v1897 = vadd.f32 0.0, %v1896
        %1898 = vdwg.mxu0
        %v1899 = vadd.f32 %v1813, %v1895
        %v1900 = vadd.f32 %v1814, %v1897
        %v1901 = vld [vmem:[%s5] sm:$0xff]
        %1903 = vset.pattern.permute.xlu0 0
        %1904 = vperm.xlu0 %1903, %v1901
        %v1905 = vpop.permute.xlu0 %1904
        %v1907 = vadd.f32 %v1899, %v1905
        %v1908 = vadd.f32 %v1900, %v1905
        %v1909 = vadd.f32 %v1907, %v253
        %v1910 = vadd.f32 %v1908, %v254
        %v1911 = vmax.f32 %v1909, 0.0
        %v1912 = vmax.f32 %v1910, 0.0
        %1913 = vst [vmem:[%s245] sm:$0xff] %v1911
        %1914 = vst [vmem:[%s245 + $0x8] sm:$0xff] %v1912
        %s1915 = sand.u32 %s159, 1
        %s1916 = scalar_lea.sflag [#allocation3], %s1915
        %s1917 = sand.u32 %s159, 1
        %s1918 = smul.addr %s1917, 16
        %s1919 = scalar_lea.vmem [#allocation2], %s1918
        // Predicated region
        $region45: #{tpu_custom_call.1} parent=43 // pred_check
          %p1920 = pneg %p169
        $region46: #{tpu_custom_call.1} parent=43 // pred_check_branch
          %1922 = sbr.rel (%p1920) target = $region48
        $region47: #{tpu_custom_call.1} parent=43 // pred_region
          %s1923 = smul.u32 2, %s20
          %s1925 = ssub.s32 256, 256
          %1926 = vsyncadd %s1916, %s1925
          %s1927 = smul.addr %s1923, 128
          %s1928 = scalar_lea.hbm %s6, %s1927
          %s1930 = sshll.u32 %s1919, 4
          %s1931 = int_to_ptr.vmem [resolvable:$true] %s1930
          %1933 = dma.vmem_to_hbm [thread:$0]  %s1931, 256, %s1928, %s1916
        $region48: #{tpu_custom_call.1} parent=43 // pred_fallthru
          _
      $region44: #{tpu_custom_call.1} parent=5 // pred_fallthru
        _
      %p1934 = scmp.le.s32.totalorder 2, %s15
      // Predicated region
      $region49: #{tpu_custom_call.1} parent=5 // pred_check
        %p1935 = pneg %p1934
      $region50: #{tpu_custom_call.1} parent=5 // pred_check_branch
        %1937 = sbr.rel (%p1935) target = $region52
      $region51: #{tpu_custom_call.1} parent=5 // pred_region
        %s1938 = ssub.s32 %s15, 2
        // Predicated region
        $region53: #{tpu_custom_call.1} parent=51 // pred_check
          %p1939 = pneg %p175
        $region54: #{tpu_custom_call.1} parent=51 // pred_check_branch
          %1941 = sbr.rel (%p1939) target = $region56
        $region55: #{tpu_custom_call.1} parent=51 // pred_region
          %s1942 = sand.u32 %s160, 1
          %s1943 = scalar_lea.sflag [#allocation3], %s1942
          %s1944 = sand.u32 %s160, 1
          %s1945 = smul.addr %s1944, 16
          %s1946 = scalar_lea.vmem [#allocation2], %s1945
          %1947 = dma.done %s1943, 256
        $region56: #{tpu_custom_call.1} parent=51 // pred_fallthru
          _
      $region52: #{tpu_custom_call.1} parent=5 // pred_fallthru
        _
    $region6: #{tpu_custom_call.1} parent=1 // loop_footer
      %s19 = sadd.s32 1, %s15
    $region7: #{tpu_custom_call.1} parent=1 // loop_footer_branch
      %14 = sbr.rel target = $region3
    $region8: #{tpu_custom_call.1} parent=1 // loop_exit
      _
    %1948 = vsyncpa [#allocation3], 1
    %s1949 = scalar_lea.sflag [#allocation3], 1
    %1950 = vsyncpa %s1949, 1

</llo_original>
